<compile_context>
chip_gen: v7x
topology: tpu7x:2x2x1
jax: 0.10.0
libtpu: 0.0.40
codegen_flags: <defaults>
</compile_context>

<pallas_src>
import functools

import jax
import jax.numpy as jnp
from jax import lax
from jax.experimental import pallas as pl
from jax.experimental.pallas import tpu as pltpu


# ----------------------------- Pallas kernel --------------------------------
def ncf_kernel(uid_ref, iid_ref, utab_ref, itab_ref,
               w1u_ref, w1i_ref, b1_ref, w2_ref, b2_ref, w3_ref, b3_ref,
               wg_ref, wm_ref, bo_ref, out_ref):
    f32 = jnp.float32
    tb = uid_ref.shape[0]
    n_users = utab_ref.shape[0]
    n_items = itab_ref.shape[0]

    uid = uid_ref[...]                                            # (TB, 1) int32
    iid = iid_ref[...]                                            # (TB, 1) int32

    # Fused embedding gather via one-hot matmul against the VMEM-resident
    # fused tables [gmf_emb | mlp_emb]  ->  one MXU gather per side.
    onehot_u = (lax.broadcasted_iota(jnp.int32, (tb, n_users), 1) == uid).astype(f32)
    onehot_i = (lax.broadcasted_iota(jnp.int32, (tb, n_items), 1) == iid).astype(f32)
    u_emb = jnp.dot(onehot_u, utab_ref[...], preferred_element_type=f32)  # (TB, 2E)
    i_emb = jnp.dot(onehot_i, itab_ref[...], preferred_element_type=f32)  # (TB, 2E)

    # GMF branch lives in the first E lanes of `prod`; the zero-padded output
    # head weight (wg_full) selects it, so no in-kernel lane slicing is needed.
    prod = u_emb * i_emb                                          # (TB, 2E)

    # MLP branch: concat(mlp_u, mlp_i) @ w1 == u_emb @ [0;w1_u] + i_emb @ [0;w1_i].
    h = (jnp.dot(u_emb, w1u_ref[...], preferred_element_type=f32)
         + jnp.dot(i_emb, w1i_ref[...], preferred_element_type=f32)
         + b1_ref[...])
    h = jnp.maximum(h, 0.0)                                       # ReLU (dropout = id)
    h = jnp.dot(h, w2_ref[...], preferred_element_type=f32) + b2_ref[...]
    h = jnp.maximum(h, 0.0)
    h = jnp.dot(h, w3_ref[...], preferred_element_type=f32) + b3_ref[...]
    h = jnp.maximum(h, 0.0)                                       # (TB, 32)

    # Lane-dense output head: (1, K) · (TB, K)^T -> (1, TB) (q@k^T pattern).
    dn = (((1,), (1,)), ((), ()))
    logit = (lax.dot_general(wg_ref[...], prod, dn, preferred_element_type=f32)
             + lax.dot_general(wm_ref[...], h, dn, preferred_element_type=f32)
             + bo_ref[...])                                       # (1, TB)
    out_ref[...] = jax.nn.sigmoid(logit)


# ----------------------------- wrapper ---------------------------------------
@functools.partial(jax.jit, static_argnames=("tb",))
def ncf_forward(user, item, params, *, tb=128):
    """NCF forward. user/item: int (B,). Returns sigmoid preds, shape (B,)."""
    B = user.shape[0]
    n_tiles = pl.cdiv(B, tb)
    b_pad = n_tiles * tb
    pad = b_pad - B

    # Pad batch to a multiple of the tile (padded rows reuse index 0; sliced off).
    uid = jnp.pad(user.astype(jnp.int32), (0, pad)).reshape(b_pad, 1)
    iid = jnp.pad(item.astype(jnp.int32), (0, pad)).reshape(b_pad, 1)

    E = params["user_gmf_emb"].shape[1]
    h1 = params["w1_u"].shape[1]

    # Fuse GMF / MLP tables column-wise -> one one-hot matmul per side.
    utab = jnp.concatenate([params["user_gmf_emb"], params["user_mlp_emb"]], axis=1)
    itab = jnp.concatenate([params["item_gmf_emb"], params["item_mlp_emb"]], axis=1)
    # Zero-pad weights so the kernel consumes the fused (TB, 2E) embeddings
    # directly (no lane slicing / concat inside the kernel).
    zero_w1 = jnp.zeros((E, h1), jnp.float32)
    w1u_full = jnp.concatenate([zero_w1, params["w1_u"]], axis=0)            # (2E, h1)
    w1i_full = jnp.concatenate([zero_w1, params["w1_i"]], axis=0)            # (2E, h1)
    wg_full = jnp.concatenate([params["wg"], jnp.zeros((1, E), jnp.float32)], axis=1)

    weights = (utab, itab, w1u_full, w1i_full, params["b1"],
               params["w2"], params["b2"], params["w3"], params["b3"],
               wg_full, params["wm"], params["bo"])

    idx_spec = pl.BlockSpec((tb, 1), lambda i: (i, 0))
    const_specs = [pl.BlockSpec(w.shape, lambda i: (0, 0)) for w in weights]

    out = pl.pallas_call(
        ncf_kernel,
        out_shape=jax.ShapeDtypeStruct((1, b_pad), jnp.float32),
        grid=(n_tiles,),
        in_specs=[idx_spec, idx_spec] + const_specs,
        out_specs=pl.BlockSpec((1, tb), lambda i: (0, i)),
        compiler_params=pltpu.CompilerParams(
            dimension_semantics=("parallel",),
            vmem_limit_bytes=32 * 1024 * 1024),
    )(uid, iid, *weights)

    # (1, B_pad) -> (B,)  (torch .squeeze() on the trailing dim)
    return out[0, :B]


# ----------------------------- parameter init -------------------------------
def xavier_uniform(key, shape):
    fan_in, fan_out = shape
    bound = float(jnp.sqrt(6.0 / (fan_in + fan_out)))
    return jax.random.uniform(key, shape, jnp.float32, -bound, bound)


def init_ncf_params(key, num_users, num_items, embedding_size=64,
                    mlp_layers=(128, 64, 32)):
    keys = jax.random.split(key, 12)
    E = embedding_size
    p = {}
    # Embeddings (xavier_uniform, as in the PyTorch module).
    p["user_gmf_emb"] = xavier_uniform(keys[0], (num_users, E))
    p["item_gmf_emb"] = xavier_uniform(keys[1], (num_items, E))
    p["user_mlp_emb"] = xavier_uniform(keys[2], (num_users, E))
    p["item_mlp_emb"] = xavier_uniform(keys[3], (num_items, E))
    # MLP: (2E -> 128 -> 64 -> 32). Weights stored (in, out); w1 split in halves.
    dims = [2 * E] + list(mlp_layers)
    w1 = xavier_uniform(keys[4], (dims[0], dims[1]))
    p["w1_u"], p["w1_i"] = w1[:E, :], w1[E:, :]
    bb = 1.0 / float(jnp.sqrt(jnp.float32(dims[0])))
    p["b1"] = jax.random.uniform(keys[5], (1, dims[1]), jnp.float32, -bb, bb)
    p["w2"] = xavier_uniform(keys[6], (dims[1], dims[2]))
    bb = 1.0 / float(jnp.sqrt(jnp.float32(dims[1])))
    p["b2"] = jax.random.uniform(keys[7], (1, dims[2]), jnp.float32, -bb, bb)
    p["w3"] = xavier_uniform(keys[8], (dims[2], dims[3]))
    bb = 1.0 / float(jnp.sqrt(jnp.float32(dims[2])))
    p["b3"] = jax.random.uniform(keys[9], (1, dims[3]), jnp.float32, -bb, bb)
    # Output head: Linear(E + 32, 1), split into GMF / MLP halves as row vectors.
    wout = xavier_uniform(keys[10], (E + mlp_layers[-1], 1))
    p["wg"] = wout[:E, :].T                                       # (1, E)
    p["wm"] = wout[E:, :].T                                       # (1, 32)
    bb = 1.0 / float(jnp.sqrt(jnp.float32(E + mlp_layers[-1])))
    p["bo"] = jax.random.uniform(keys[11], (1, 1), jnp.float32, -bb, bb)
    return p


# ----------------------------- reference (pure JAX) --------------------------
def ncf_reference(user, item, params):
    gmf = (jnp.take(params["user_gmf_emb"], user, axis=0)
           * jnp.take(params["item_gmf_emb"], item, axis=0))
    mlp_in = jnp.concatenate([jnp.take(params["user_mlp_emb"], user, axis=0),
                              jnp.take(params["item_mlp_emb"], item, axis=0)], axis=1)
    w1 = jnp.concatenate([params["w1_u"], params["w1_i"]], axis=0)
    h = jnp.maximum(mlp_in @ w1 + params["b1"], 0.0)
    h = jnp.maximum(h @ params["w2"] + params["b2"], 0.0)
    h = jnp.maximum(h @ params["w3"] + params["b3"], 0.0)
    wout = jnp.concatenate([params["wg"], params["wm"]], axis=1).T  # (E+32, 1)
    logit = jnp.concatenate([gmf, h], axis=1) @ wout + params["bo"]
    return jnp.squeeze(jax.nn.sigmoid(logit), axis=-1)


if __name__ == "__main__":
    key = jax.random.PRNGKey(0)
    pkey, ukey, ikey = jax.random.split(key, 3)

    num_users, num_items, batch = 32, 48, 200   # batch pads 200 -> 256, 2 tiles
    params = init_ncf_params(pkey, num_users, num_items)

    user = jax.random.randint(ukey, (batch,), 0, num_users, dtype=jnp.int32)
    item = jax.random.randint(ikey, (batch,), 0, num_items, dtype=jnp.int32)

    out = jax.block_until_ready(ncf_forward(user, item, params, tb=128))
    ref = ncf_reference(user, item, params)

    assert out.shape == (batch,), out.shape
    assert jnp.allclose(out, ref, atol=1e-5, rtol=1e-5), (out, ref)

    print("KERNEL_OK")
</pallas_src>

<mosaic_0001>
module attributes {stable_mosaic.version = 11 : i64} {
  func.func @ncf_kernel(%arg0: i32, %arg1: memref<128x1xi32, #tpu.memory_space<vmem>>, %arg2: memref<128x1xi32, #tpu.memory_space<vmem>>, %arg3: memref<32x128xf32, #tpu.memory_space<vmem>>, %arg4: memref<48x128xf32, #tpu.memory_space<vmem>>, %arg5: memref<128x128xf32, #tpu.memory_space<vmem>>, %arg6: memref<128x128xf32, #tpu.memory_space<vmem>>, %arg7: memref<1x128xf32, #tpu.memory_space<vmem>>, %arg8: memref<128x64xf32, #tpu.memory_space<vmem>>, %arg9: memref<1x64xf32, #tpu.memory_space<vmem>>, %arg10: memref<64x32xf32, #tpu.memory_space<vmem>>, %arg11: memref<1x32xf32, #tpu.memory_space<vmem>>, %arg12: memref<1x128xf32, #tpu.memory_space<vmem>>, %arg13: memref<1x32xf32, #tpu.memory_space<vmem>>, %arg14: memref<1x1xf32, #tpu.memory_space<vmem>>, %arg15: memref<1x128xf32, #tpu.memory_space<vmem>>) attributes {dimension_semantics = [#tpu.dimension_semantics<parallel>], iteration_bounds = array<i64: 2>, scalar_prefetch = 0 : i64, scratch_operands = 0 : i64, tpu.core_type = #tpu.core_type<tc>, window_params = [{transform_indices = @transform_0, window_bounds = array<i64: 128, 1>}, {transform_indices = @transform_1, window_bounds = array<i64: 128, 1>}, {pipeline_mode = #tpu.pipeline_mode<synchronous>, transform_indices = @transform_2, window_bounds = array<i64: 32, 128>}, {pipeline_mode = #tpu.pipeline_mode<synchronous>, transform_indices = @transform_3, window_bounds = array<i64: 48, 128>}, {pipeline_mode = #tpu.pipeline_mode<synchronous>, transform_indices = @transform_4, window_bounds = array<i64: 128, 128>}, {pipeline_mode = #tpu.pipeline_mode<synchronous>, transform_indices = @transform_5, window_bounds = array<i64: 128, 128>}, {pipeline_mode = #tpu.pipeline_mode<synchronous>, transform_indices = @transform_6, window_bounds = array<i64: 1, 128>}, {pipeline_mode = #tpu.pipeline_mode<synchronous>, transform_indices = @transform_7, window_bounds = array<i64: 128, 64>}, {pipeline_mode = #tpu.pipeline_mode<synchronous>, transform_indices = @transform_8, window_bounds = array<i64: 1, 64>}, {pipeline_mode = #tpu.pipeline_mode<synchronous>, transform_indices = @transform_9, window_bounds = array<i64: 64, 32>}, {pipeline_mode = #tpu.pipeline_mode<synchronous>, transform_indices = @transform_10, window_bounds = array<i64: 1, 32>}, {pipeline_mode = #tpu.pipeline_mode<synchronous>, transform_indices = @transform_11, window_bounds = array<i64: 1, 128>}, {pipeline_mode = #tpu.pipeline_mode<synchronous>, transform_indices = @transform_12, window_bounds = array<i64: 1, 32>}, {pipeline_mode = #tpu.pipeline_mode<synchronous>, transform_indices = @transform_13, window_bounds = array<i64: 1, 1>}, {transform_indices = @transform_14, window_bounds = array<i64: 1, 128>}]} {
    %c0 = arith.constant 0 : index
    %c0_0 = arith.constant 0 : index
    %0 = vector.load %arg1[%c0, %c0_0] : memref<128x1xi32, #tpu.memory_space<vmem>>, vector<128x1xi32>
    %c0_1 = arith.constant 0 : index
    %c0_2 = arith.constant 0 : index
    %1 = vector.load %arg2[%c0_1, %c0_2] : memref<128x1xi32, #tpu.memory_space<vmem>>, vector<128x1xi32>
    %2 = tpu.iota {dimensions = array<i32: 1>} : vector<128x32xi32>
    %3 = vector.broadcast %0 : vector<128x1xi32> to vector<128x32xi32>
    %4 = arith.cmpi eq, %2, %3 : vector<128x32xi32>
    %5 = arith.extui %4 : vector<128x32xi1> to vector<128x32xi32>
    %6 = arith.sitofp %5 : vector<128x32xi32> to vector<128x32xf32>
    %7 = tpu.iota {dimensions = array<i32: 1>} : vector<128x48xi32>
    %8 = vector.broadcast %1 : vector<128x1xi32> to vector<128x48xi32>
    %9 = arith.cmpi eq, %7, %8 : vector<128x48xi32>
    %10 = arith.extui %9 : vector<128x48xi1> to vector<128x48xi32>
    %11 = arith.sitofp %10 : vector<128x48xi32> to vector<128x48xf32>
    %c0_3 = arith.constant 0 : index
    %c0_4 = arith.constant 0 : index
    %12 = vector.load %arg3[%c0_3, %c0_4] : memref<32x128xf32, #tpu.memory_space<vmem>>, vector<32x128xf32>
    %cst = arith.constant dense<0.000000e+00> : vector<128x128xf32>
    %13 = tpu.matmul %6, %12, %cst {dimension_numbers = #tpu.dot_dimension_numbers<[1], [0], [0], [1], [0, 0, 1, 1], [], []>} : vector<128x32xf32>, vector<32x128xf32>, vector<128x128xf32> -> vector<128x128xf32>
    %c0_5 = arith.constant 0 : index
    %c0_6 = arith.constant 0 : index
    %14 = vector.load %arg4[%c0_5, %c0_6] : memref<48x128xf32, #tpu.memory_space<vmem>>, vector<48x128xf32>
    %cst_7 = arith.constant dense<0.000000e+00> : vector<128x128xf32>
    %15 = tpu.matmul %11, %14, %cst_7 {dimension_numbers = #tpu.dot_dimension_numbers<[1], [0], [0], [1], [0, 0, 1, 1], [], []>} : vector<128x48xf32>, vector<48x128xf32>, vector<128x128xf32> -> vector<128x128xf32>
    %16 = arith.mulf %13, %15 : vector<128x128xf32>
    %c0_8 = arith.constant 0 : index
    %c0_9 = arith.constant 0 : index
    %17 = vector.load %arg5[%c0_8, %c0_9] : memref<128x128xf32, #tpu.memory_space<vmem>>, vector<128x128xf32>
    %cst_10 = arith.constant dense<0.000000e+00> : vector<128x128xf32>
    %18 = tpu.matmul %13, %17, %cst_10 {dimension_numbers = #tpu.dot_dimension_numbers<[1], [0], [0], [1], [0, 0, 1, 1], [], []>} : vector<128x128xf32>, vector<128x128xf32>, vector<128x128xf32> -> vector<128x128xf32>
    %c0_11 = arith.constant 0 : index
    %c0_12 = arith.constant 0 : index
    %19 = vector.load %arg6[%c0_11, %c0_12] : memref<128x128xf32, #tpu.memory_space<vmem>>, vector<128x128xf32>
    %cst_13 = arith.constant dense<0.000000e+00> : vector<128x128xf32>
    %20 = tpu.matmul %15, %19, %cst_13 {dimension_numbers = #tpu.dot_dimension_numbers<[1], [0], [0], [1], [0, 0, 1, 1], [], []>} : vector<128x128xf32>, vector<128x128xf32>, vector<128x128xf32> -> vector<128x128xf32>
    %21 = arith.addf %18, %20 : vector<128x128xf32>
    %c0_14 = arith.constant 0 : index
    %c0_15 = arith.constant 0 : index
    %22 = vector.load %arg7[%c0_14, %c0_15] : memref<1x128xf32, #tpu.memory_space<vmem>>, vector<1x128xf32>
    %23 = vector.broadcast %22 : vector<1x128xf32> to vector<128x128xf32>
    %24 = arith.addf %21, %23 : vector<128x128xf32>
    %cst_16 = arith.constant 0.000000e+00 : f32
    %25 = vector.broadcast %cst_16 : f32 to vector<128x128xf32>
    %26 = arith.maximumf %24, %25 : vector<128x128xf32>
    %c0_17 = arith.constant 0 : index
    %c0_18 = arith.constant 0 : index
    %27 = vector.load %arg8[%c0_17, %c0_18] : memref<128x64xf32, #tpu.memory_space<vmem>>, vector<128x64xf32>
    %cst_19 = arith.constant dense<0.000000e+00> : vector<128x64xf32>
    %28 = tpu.matmul %26, %27, %cst_19 {dimension_numbers = #tpu.dot_dimension_numbers<[1], [0], [0], [1], [0, 0, 1, 1], [], []>} : vector<128x128xf32>, vector<128x64xf32>, vector<128x64xf32> -> vector<128x64xf32>
    %c0_20 = arith.constant 0 : index
    %c0_21 = arith.constant 0 : index
    %29 = vector.load %arg9[%c0_20, %c0_21] : memref<1x64xf32, #tpu.memory_space<vmem>>, vector<1x64xf32>
    %30 = vector.broadcast %29 : vector<1x64xf32> to vector<128x64xf32>
    %31 = arith.addf %28, %30 : vector<128x64xf32>
    %cst_22 = arith.constant 0.000000e+00 : f32
    %32 = vector.broadcast %cst_22 : f32 to vector<128x64xf32>
    %33 = arith.maximumf %31, %32 : vector<128x64xf32>
    %c0_23 = arith.constant 0 : index
    %c0_24 = arith.constant 0 : index
    %34 = vector.load %arg10[%c0_23, %c0_24] : memref<64x32xf32, #tpu.memory_space<vmem>>, vector<64x32xf32>
    %cst_25 = arith.constant dense<0.000000e+00> : vector<128x32xf32>
    %35 = tpu.matmul %33, %34, %cst_25 {dimension_numbers = #tpu.dot_dimension_numbers<[1], [0], [0], [1], [0, 0, 1, 1], [], []>} : vector<128x64xf32>, vector<64x32xf32>, vector<128x32xf32> -> vector<128x32xf32>
    %c0_26 = arith.constant 0 : index
    %c0_27 = arith.constant 0 : index
    %36 = vector.load %arg11[%c0_26, %c0_27] : memref<1x32xf32, #tpu.memory_space<vmem>>, vector<1x32xf32>
    %37 = vector.broadcast %36 : vector<1x32xf32> to vector<128x32xf32>
    %38 = arith.addf %35, %37 : vector<128x32xf32>
    %cst_28 = arith.constant 0.000000e+00 : f32
    %39 = vector.broadcast %cst_28 : f32 to vector<128x32xf32>
    %40 = arith.maximumf %38, %39 : vector<128x32xf32>
    %c0_29 = arith.constant 0 : index
    %c0_30 = arith.constant 0 : index
    %41 = vector.load %arg12[%c0_29, %c0_30] : memref<1x128xf32, #tpu.memory_space<vmem>>, vector<1x128xf32>
    %cst_31 = arith.constant dense<0.000000e+00> : vector<1x128xf32>
    %42 = tpu.matmul %41, %16, %cst_31 {dimension_numbers = #tpu.dot_dimension_numbers<[1], [1], [0], [0], [0, 0, 1, 0], [], []>} : vector<1x128xf32>, vector<128x128xf32>, vector<1x128xf32> -> vector<1x128xf32>
    %c0_32 = arith.constant 0 : index
    %c0_33 = arith.constant 0 : index
    %43 = vector.load %arg13[%c0_32, %c0_33] : memref<1x32xf32, #tpu.memory_space<vmem>>, vector<1x32xf32>
    %cst_34 = arith.constant dense<0.000000e+00> : vector<1x128xf32>
    %44 = tpu.matmul %43, %40, %cst_34 {dimension_numbers = #tpu.dot_dimension_numbers<[1], [1], [0], [0], [0, 0, 1, 0], [], []>} : vector<1x32xf32>, vector<128x32xf32>, vector<1x128xf32> -> vector<1x128xf32>
    %45 = arith.addf %42, %44 : vector<1x128xf32>
    %c0_35 = arith.constant 0 : index
    %c0_36 = arith.constant 0 : index
    %46 = vector.load %arg14[%c0_35, %c0_36] : memref<1x1xf32, #tpu.memory_space<vmem>>, vector<1x1xf32>
    %47 = vector.broadcast %46 : vector<1x1xf32> to vector<1x128xf32>
    %48 = arith.addf %45, %47 : vector<1x128xf32>
    %49 = arith.negf %48 : vector<1x128xf32>
    %50 = math.exp %49 : vector<1x128xf32>
    %cst_37 = arith.constant 1.000000e+00 : f32
    %51 = vector.broadcast %cst_37 : f32 to vector<1x128xf32>
    %52 = arith.addf %51, %50 : vector<1x128xf32>
    %53 = arith.divf %51, %52 : vector<1x128xf32>
    %c0_38 = arith.constant 0 : index
    %c0_39 = arith.constant 0 : index
    %54 = vector.load %arg15[%c0_38, %c0_39] : memref<1x128xf32, #tpu.memory_space<vmem>>, vector<1x128xf32>
    tpu.vector_store %arg15[%c0_38, %c0_39], %53 {strides = array<i32>} : memref<1x128xf32, #tpu.memory_space<vmem>>, vector<1x128xf32>,
    return
  }
  func.func @transform_0(%arg0: i32) -> (i32, i32) {
    %c0_i32 = arith.constant 0 : i32
    %c0_i32_0 = arith.constant 0 : i32
    return %arg0, %c0_i32 : i32, i32
  }
  func.func @transform_1(%arg0: i32) -> (i32, i32) {
    %c0_i32 = arith.constant 0 : i32
    %c0_i32_0 = arith.constant 0 : i32
    return %arg0, %c0_i32 : i32, i32
  }
  func.func @transform_2(%arg0: i32) -> (i32, i32) {
    %c0_i32 = arith.constant 0 : i32
    %c0_i32_0 = arith.constant 0 : i32
    %c0_i32_1 = arith.constant 0 : i32
    return %c0_i32, %c0_i32_0 : i32, i32
  }
  func.func @transform_3(%arg0: i32) -> (i32, i32) {
    %c0_i32 = arith.constant 0 : i32
    %c0_i32_0 = arith.constant 0 : i32
    %c0_i32_1 = arith.constant 0 : i32
    return %c0_i32, %c0_i32_0 : i32, i32
  }
  func.func @transform_4(%arg0: i32) -> (i32, i32) {
    %c0_i32 = arith.constant 0 : i32
    %c0_i32_0 = arith.constant 0 : i32
    %c0_i32_1 = arith.constant 0 : i32
    return %c0_i32, %c0_i32_0 : i32, i32
  }
  func.func @transform_5(%arg0: i32) -> (i32, i32) {
    %c0_i32 = arith.constant 0 : i32
    %c0_i32_0 = arith.constant 0 : i32
    %c0_i32_1 = arith.constant 0 : i32
    return %c0_i32, %c0_i32_0 : i32, i32
  }
  func.func @transform_6(%arg0: i32) -> (i32, i32) {
    %c0_i32 = arith.constant 0 : i32
    %c0_i32_0 = arith.constant 0 : i32
    %c0_i32_1 = arith.constant 0 : i32
    return %c0_i32, %c0_i32_0 : i32, i32
  }
  func.func @transform_7(%arg0: i32) -> (i32, i32) {
    %c0_i32 = arith.constant 0 : i32
    %c0_i32_0 = arith.constant 0 : i32
    %c0_i32_1 = arith.constant 0 : i32
    return %c0_i32, %c0_i32_0 : i32, i32
  }
  func.func @transform_8(%arg0: i32) -> (i32, i32) {
    %c0_i32 = arith.constant 0 : i32
    %c0_i32_0 = arith.constant 0 : i32
    %c0_i32_1 = arith.constant 0 : i32
    return %c0_i32, %c0_i32_0 : i32, i32
  }
  func.func @transform_9(%arg0: i32) -> (i32, i32) {
    %c0_i32 = arith.constant 0 : i32
    %c0_i32_0 = arith.constant 0 : i32
    %c0_i32_1 = arith.constant 0 : i32
    return %c0_i32, %c0_i32_0 : i32, i32
  }
  func.func @transform_10(%arg0: i32) -> (i32, i32) {
    %c0_i32 = arith.constant 0 : i32
    %c0_i32_0 = arith.constant 0 : i32
    %c0_i32_1 = arith.constant 0 : i32
    return %c0_i32, %c0_i32_0 : i32, i32
  }
  func.func @transform_11(%arg0: i32) -> (i32, i32) {
    %c0_i32 = arith.constant 0 : i32
    %c0_i32_0 = arith.constant 0 : i32
    %c0_i32_1 = arith.constant 0 : i32
    return %c0_i32, %c0_i32_0 : i32, i32
  }
  func.func @transform_12(%arg0: i32) -> (i32, i32) {
    %c0_i32 = arith.constant 0 : i32
    %c0_i32_0 = arith.constant 0 : i32
    %c0_i32_1 = arith.constant 0 : i32
    return %c0_i32, %c0_i32_0 : i32, i32
  }
  func.func @transform_13(%arg0: i32) -> (i32, i32) {
    %c0_i32 = arith.constant 0 : i32
    %c0_i32_0 = arith.constant 0 : i32
    %c0_i32_1 = arith.constant 0 : i32
    return %c0_i32, %c0_i32_0 : i32, i32
  }
  func.func @transform_14(%arg0: i32) -> (i32, i32) {
    %c0_i32 = arith.constant 0 : i32
    %c0_i32_0 = arith.constant 0 : i32
    return %c0_i32, %arg0 : i32, i32
  }
}

</mosaic_0001>

<llo_original>
// kernel: ncf_forward.1
$region0: #{ncf_forward.1}
  #allocation0 [shape = 'u32[]', space=smem, size = 0x4, offset = 0x4, fixed_abs, tag = 'smem constant byte address 0x4 - core index']
  #allocation1 [shape = 'u32[144,128]{1,0:T(1,128)}', space=vmem, size = 0x12000, scoped, tag = 'internal scratch']
  #allocation2 [shape = 'f32[1,1]{1,0:T(1,128)S(1)}', space=vmem, size = 0x200, scoped, tag = 'scoped memory for ncf_forward.1']
  %s0 = inlined_call_operand.vmem [shape: s32[256,1], index: 0, kind: input, shape index: {}]
  %s1 = inlined_call_operand.vmem [shape: s32[256,1], index: 1, kind: input, shape index: {}]
  %s2 = inlined_call_operand.vmem [shape: f32[32,128], index: 2, kind: input, shape index: {}]
  %s3 = inlined_call_operand.vmem [shape: f32[48,128], index: 3, kind: input, shape index: {}]
  %s4 = inlined_call_operand.vmem [shape: f32[128,128], index: 4, kind: input, shape index: {}]
  %s5 = inlined_call_operand.vmem [shape: f32[128,128], index: 5, kind: input, shape index: {}]
  %s6 = inlined_call_operand.vmem [shape: f32[1,128], index: 6, kind: input, shape index: {}]
  %s7 = inlined_call_operand.vmem [shape: f32[128,64], index: 7, kind: input, shape index: {}]
  %s8 = inlined_call_operand.vmem [shape: f32[1,64], index: 8, kind: input, shape index: {}]
  %s9 = inlined_call_operand.vmem [shape: f32[64,32], index: 9, kind: input, shape index: {}]
  %s10 = inlined_call_operand.vmem [shape: f32[1,32], index: 10, kind: input, shape index: {}]
  %s11 = inlined_call_operand.vmem [shape: f32[1,128], index: 11, kind: input, shape index: {}]
  %s12 = inlined_call_operand.vmem [shape: f32[1,32], index: 12, kind: input, shape index: {}]
  %s13 = inlined_call_operand.<no memory space> [shape: f32[1,1], index: 13, kind: input, shape index: {}]
  %s14 = inlined_call_operand.hbm [shape: f32[1,256], index: 14, kind: output, shape index: {}]
  %s15 = sld [smem:[#allocation0]]
  $region89: #{ncf_forward.1} parent=0
    _
  %s17 = ssub.s32 1, %s15
  %s18 = scalar_select 0, %s17, %s15
  %v19 = vstv %s13
  %20 = vst [vmem:[#allocation2] sm:$0x1] %v19
  $region1: #{ncf_forward.1} parent=0
    #allocation3 [shape = 'u8[1024]{0}', space=vmem, size = 0x400, scoped, tag = 'output window, operand 0']
    #allocation4 [shape = 's32[2]{0}', space=sflag, size = 0x8, scoped, tag = 'scoped memory for ncf_forward.1']
    %21 = vsyncpa [#allocation4], 0
    %s22 = scalar_lea.sflag [#allocation4], 1
    %23 = vsyncpa %s22, 0
    loop: start=0, step=1, limit=4
    $region2: #{ncf_forward.1} parent=1 // loop_pre_header
      _
    $region3: #{ncf_forward.1} parent=1 // loop_header
      %s25 = sphi 0, %s29
      %p26 = scmp.ge.s32.totalorder %s25, 4
      %s35 = sphi 0, %s37
      %s38 = sphi 0, %s35
      %s39 = sphi 0, %s38
      %s55 = sphi 0, %s39
      %s61 = sphi 0, %s63
      %s64 = sphi 0, %s61
      %s65 = sphi 0, %s64
      %s81 = sphi 0, %s65
      %s85 = sphi 0, %s85
      %s87 = sphi 0, %s85
      %s88 = sphi 0, %s87
      %s102 = sphi 0, %s88
      %s106 = sphi 0, %s106
      %s108 = sphi 0, %s106
      %s109 = sphi 0, %s108
      %s123 = sphi 0, %s109
      %s127 = sphi 0, %s127
      %s129 = sphi 0, %s127
      %s130 = sphi 0, %s129
      %s144 = sphi 0, %s130
      %s148 = sphi 0, %s148
      %s150 = sphi 0, %s148
      %s151 = sphi 0, %s150
      %s165 = sphi 0, %s151
      %s169 = sphi 0, %s169
      %s171 = sphi 0, %s169
      %s172 = sphi 0, %s171
      %s186 = sphi 0, %s172
      %s190 = sphi 0, %s190
      %s192 = sphi 0, %s190
      %s193 = sphi 0, %s192
      %s207 = sphi 0, %s193
      %s211 = sphi 0, %s211
      %s213 = sphi 0, %s211
      %s214 = sphi 0, %s213
      %s228 = sphi 0, %s214
      %s232 = sphi 0, %s232
      %s234 = sphi 0, %s232
      %s235 = sphi 0, %s234
      %s249 = sphi 0, %s235
      %s253 = sphi 0, %s253
      %s255 = sphi 0, %s253
      %s256 = sphi 0, %s255
      %s270 = sphi 0, %s256
      %s274 = sphi 0, %s274
      %s276 = sphi 0, %s274
      %s277 = sphi 0, %s276
      %s291 = sphi 0, %s277
      %s295 = sphi 0, %s295
      %s297 = sphi 0, %s295
      %s298 = sphi 0, %s297
      %s312 = sphi 0, %s298
      %s316 = sphi 0, %s316
      %s318 = sphi 0, %s316
      %s319 = sphi 0, %s318
      %s333 = sphi 0, %s319
      %s339 = sphi 0, %s341
      %s342 = sphi 0, %s339
      %s343 = sphi 0, %s342
      %s359 = sphi 0, %s343
    $region4: #{ncf_forward.1} parent=1 // loop_header_branch
      %28 = sbr.rel (%p26) target = $region8
    $region5: #{ncf_forward.1} parent=1 // loop_body
      %s30 = ssub.s32 %s25, 1
      %s31 = ssub.s32 %s25, 2
      %s32 = sadd.s32 %s25, 1
      %s33 = ssub.s32 %s25, %s32
      %p34 = scmp.eq.s32.totalorder %s33, 0
      %s36 = sadd.s32 %s35, 1
      %s37 = scalar_select %p34, %s35, %s36
      %p40 = pneg %p34
      %p41 = scmp.eq.s32.totalorder %s25, 1
      %p42 = por %p40, %p41
      %p43 = scmp.ne.s32.totalorder %s35, %s38
      %p44 = scmp.eq.s32.totalorder %s25, 0
      %p45 = por %p43, %p44
      %p46 = scmp.ne.s32.totalorder %s35, %s38
      %p47 = scmp.eq.s32.totalorder %s30, 1
      %p48 = por %p46, %p47
      %p49 = scmp.ne.s32.totalorder %s38, %s39
      %p50 = scmp.eq.s32.totalorder %s30, 0
      %p51 = por %p49, %p50
      %p52 = scmp.ne.s32.totalorder %s38, %s39
      %p53 = scmp.eq.s32.totalorder %s31, 1
      %p54 = por %p52, %p53
      %p56 = scmp.ne.s32.totalorder %s39, %s55
      %p57 = scmp.eq.s32.totalorder %s31, 0
      %p58 = por %p56, %p57
      %s59 = ssub.s32 %s25, %s32
      %p60 = scmp.eq.s32.totalorder %s59, 0
      %s62 = sadd.s32 %s61, 1
      %s63 = scalar_select %p60, %s61, %s62
      %p66 = pneg %p60
      %p67 = scmp.eq.s32.totalorder %s25, 1
      %p68 = por %p66, %p67
      %p69 = scmp.ne.s32.totalorder %s61, %s64
      %p70 = scmp.eq.s32.totalorder %s25, 0
      %p71 = por %p69, %p70
      %p72 = scmp.ne.s32.totalorder %s61, %s64
      %p73 = scmp.eq.s32.totalorder %s30, 1
      %p74 = por %p72, %p73
      %p75 = scmp.ne.s32.totalorder %s64, %s65
      %p76 = scmp.eq.s32.totalorder %s30, 0
      %p77 = por %p75, %p76
      %p78 = scmp.ne.s32.totalorder %s64, %s65
      %p79 = scmp.eq.s32.totalorder %s31, 1
      %p80 = por %p78, %p79
      %p82 = scmp.ne.s32.totalorder %s65, %s81
      %p83 = scmp.eq.s32.totalorder %s31, 0
      %p84 = por %p82, %p83
      %s86 = sadd.s32 %s85, 1
      %p89 = scmp.eq.s32.totalorder %s25, 1
      %p90 = scmp.ne.s32.totalorder %s85, %s87
      %p91 = scmp.eq.s32.totalorder %s25, 0
      %p92 = por %p90, %p91
      %p93 = scmp.ne.s32.totalorder %s85, %s87
      %p94 = scmp.eq.s32.totalorder %s30, 1
      %p95 = por %p93, %p94
      %p96 = scmp.ne.s32.totalorder %s87, %s88
      %p97 = scmp.eq.s32.totalorder %s30, 0
      %p98 = por %p96, %p97
      %p99 = scmp.ne.s32.totalorder %s87, %s88
      %p100 = scmp.eq.s32.totalorder %s31, 1
      %p101 = por %p99, %p100
      %p103 = scmp.ne.s32.totalorder %s88, %s102
      %p104 = scmp.eq.s32.totalorder %s31, 0
      %p105 = por %p103, %p104
      %s107 = sadd.s32 %s106, 1
      %p110 = scmp.eq.s32.totalorder %s25, 1
      %p111 = scmp.ne.s32.totalorder %s106, %s108
      %p112 = scmp.eq.s32.totalorder %s25, 0
      %p113 = por %p111, %p112
      %p114 = scmp.ne.s32.totalorder %s106, %s108
      %p115 = scmp.eq.s32.totalorder %s30, 1
      %p116 = por %p114, %p115
      %p117 = scmp.ne.s32.totalorder %s108, %s109
      %p118 = scmp.eq.s32.totalorder %s30, 0
      %p119 = por %p117, %p118
      %p120 = scmp.ne.s32.totalorder %s108, %s109
      %p121 = scmp.eq.s32.totalorder %s31, 1
      %p122 = por %p120, %p121
      %p124 = scmp.ne.s32.totalorder %s109, %s123
      %p125 = scmp.eq.s32.totalorder %s31, 0
      %p126 = por %p124, %p125
      %s128 = sadd.s32 %s127, 1
      %p131 = scmp.eq.s32.totalorder %s25, 1
      %p132 = scmp.ne.s32.totalorder %s127, %s129
      %p133 = scmp.eq.s32.totalorder %s25, 0
      %p134 = por %p132, %p133
      %p135 = scmp.ne.s32.totalorder %s127, %s129
      %p136 = scmp.eq.s32.totalorder %s30, 1
      %p137 = por %p135, %p136
      %p138 = scmp.ne.s32.totalorder %s129, %s130
      %p139 = scmp.eq.s32.totalorder %s30, 0
      %p140 = por %p138, %p139
      %p141 = scmp.ne.s32.totalorder %s129, %s130
      %p142 = scmp.eq.s32.totalorder %s31, 1
      %p143 = por %p141, %p142
      %p145 = scmp.ne.s32.totalorder %s130, %s144
      %p146 = scmp.eq.s32.totalorder %s31, 0
      %p147 = por %p145, %p146
      %s149 = sadd.s32 %s148, 1
      %p152 = scmp.eq.s32.totalorder %s25, 1
      %p153 = scmp.ne.s32.totalorder %s148, %s150
      %p154 = scmp.eq.s32.totalorder %s25, 0
      %p155 = por %p153, %p154
      %p156 = scmp.ne.s32.totalorder %s148, %s150
      %p157 = scmp.eq.s32.totalorder %s30, 1
      %p158 = por %p156, %p157
      %p159 = scmp.ne.s32.totalorder %s150, %s151
      %p160 = scmp.eq.s32.totalorder %s30, 0
      %p161 = por %p159, %p160
      %p162 = scmp.ne.s32.totalorder %s150, %s151
      %p163 = scmp.eq.s32.totalorder %s31, 1
      %p164 = por %p162, %p163
      %p166 = scmp.ne.s32.totalorder %s151, %s165
      %p167 = scmp.eq.s32.totalorder %s31, 0
      %p168 = por %p166, %p167
      %s170 = sadd.s32 %s169, 1
      %p173 = scmp.eq.s32.totalorder %s25, 1
      %p174 = scmp.ne.s32.totalorder %s169, %s171
      %p175 = scmp.eq.s32.totalorder %s25, 0
      %p176 = por %p174, %p175
      %p177 = scmp.ne.s32.totalorder %s169, %s171
      %p178 = scmp.eq.s32.totalorder %s30, 1
      %p179 = por %p177, %p178
      %p180 = scmp.ne.s32.totalorder %s171, %s172
      %p181 = scmp.eq.s32.totalorder %s30, 0
      %p182 = por %p180, %p181
      %p183 = scmp.ne.s32.totalorder %s171, %s172
      %p184 = scmp.eq.s32.totalorder %s31, 1
      %p185 = por %p183, %p184
      %p187 = scmp.ne.s32.totalorder %s172, %s186
      %p188 = scmp.eq.s32.totalorder %s31, 0
      %p189 = por %p187, %p188
      %s191 = sadd.s32 %s190, 1
      %p194 = scmp.eq.s32.totalorder %s25, 1
      %p195 = scmp.ne.s32.totalorder %s190, %s192
      %p196 = scmp.eq.s32.totalorder %s25, 0
      %p197 = por %p195, %p196
      %p198 = scmp.ne.s32.totalorder %s190, %s192
      %p199 = scmp.eq.s32.totalorder %s30, 1
      %p200 = por %p198, %p199
      %p201 = scmp.ne.s32.totalorder %s192, %s193
      %p202 = scmp.eq.s32.totalorder %s30, 0
      %p203 = por %p201, %p202
      %p204 = scmp.ne.s32.totalorder %s192, %s193
      %p205 = scmp.eq.s32.totalorder %s31, 1
      %p206 = por %p204, %p205
      %p208 = scmp.ne.s32.totalorder %s193, %s207
      %p209 = scmp.eq.s32.totalorder %s31, 0
      %p210 = por %p208, %p209
      %s212 = sadd.s32 %s211, 1
      %p215 = scmp.eq.s32.totalorder %s25, 1
      %p216 = scmp.ne.s32.totalorder %s211, %s213
      %p217 = scmp.eq.s32.totalorder %s25, 0
      %p218 = por %p216, %p217
      %p219 = scmp.ne.s32.totalorder %s211, %s213
      %p220 = scmp.eq.s32.totalorder %s30, 1
      %p221 = por %p219, %p220
      %p222 = scmp.ne.s32.totalorder %s213, %s214
      %p223 = scmp.eq.s32.totalorder %s30, 0
      %p224 = por %p222, %p223
      %p225 = scmp.ne.s32.totalorder %s213, %s214
      %p226 = scmp.eq.s32.totalorder %s31, 1
      %p227 = por %p225, %p226
      %p229 = scmp.ne.s32.totalorder %s214, %s228
      %p230 = scmp.eq.s32.totalorder %s31, 0
      %p231 = por %p229, %p230
      %s233 = sadd.s32 %s232, 1
      %p236 = scmp.eq.s32.totalorder %s25, 1
      %p237 = scmp.ne.s32.totalorder %s232, %s234
      %p238 = scmp.eq.s32.totalorder %s25, 0
      %p239 = por %p237, %p238
      %p240 = scmp.ne.s32.totalorder %s232, %s234
      %p241 = scmp.eq.s32.totalorder %s30, 1
      %p242 = por %p240, %p241
      %p243 = scmp.ne.s32.totalorder %s234, %s235
      %p244 = scmp.eq.s32.totalorder %s30, 0
      %p245 = por %p243, %p244
      %p246 = scmp.ne.s32.totalorder %s234, %s235
      %p247 = scmp.eq.s32.totalorder %s31, 1
      %p248 = por %p246, %p247
      %p250 = scmp.ne.s32.totalorder %s235, %s249
      %p251 = scmp.eq.s32.totalorder %s31, 0
      %p252 = por %p250, %p251
      %s254 = sadd.s32 %s253, 1
      %p257 = scmp.eq.s32.totalorder %s25, 1
      %p258 = scmp.ne.s32.totalorder %s253, %s255
      %p259 = scmp.eq.s32.totalorder %s25, 0
      %p260 = por %p258, %p259
      %p261 = scmp.ne.s32.totalorder %s253, %s255
      %p262 = scmp.eq.s32.totalorder %s30, 1
      %p263 = por %p261, %p262
      %p264 = scmp.ne.s32.totalorder %s255, %s256
      %p265 = scmp.eq.s32.totalorder %s30, 0
      %p266 = por %p264, %p265
      %p267 = scmp.ne.s32.totalorder %s255, %s256
      %p268 = scmp.eq.s32.totalorder %s31, 1
      %p269 = por %p267, %p268
      %p271 = scmp.ne.s32.totalorder %s256, %s270
      %p272 = scmp.eq.s32.totalorder %s31, 0
      %p273 = por %p271, %p272
      %s275 = sadd.s32 %s274, 1
      %p278 = scmp.eq.s32.totalorder %s25, 1
      %p279 = scmp.ne.s32.totalorder %s274, %s276
      %p280 = scmp.eq.s32.totalorder %s25, 0
      %p281 = por %p279, %p280
      %p282 = scmp.ne.s32.totalorder %s274, %s276
      %p283 = scmp.eq.s32.totalorder %s30, 1
      %p284 = por %p282, %p283
      %p285 = scmp.ne.s32.totalorder %s276, %s277
      %p286 = scmp.eq.s32.totalorder %s30, 0
      %p287 = por %p285, %p286
      %p288 = scmp.ne.s32.totalorder %s276, %s277
      %p289 = scmp.eq.s32.totalorder %s31, 1
      %p290 = por %p288, %p289
      %p292 = scmp.ne.s32.totalorder %s277, %s291
      %p293 = scmp.eq.s32.totalorder %s31, 0
      %p294 = por %p292, %p293
      %s296 = sadd.s32 %s295, 1
      %p299 = scmp.eq.s32.totalorder %s25, 1
      %p300 = scmp.ne.s32.totalorder %s295, %s297
      %p301 = scmp.eq.s32.totalorder %s25, 0
      %p302 = por %p300, %p301
      %p303 = scmp.ne.s32.totalorder %s295, %s297
      %p304 = scmp.eq.s32.totalorder %s30, 1
      %p305 = por %p303, %p304
      %p306 = scmp.ne.s32.totalorder %s297, %s298
      %p307 = scmp.eq.s32.totalorder %s30, 0
      %p308 = por %p306, %p307
      %p309 = scmp.ne.s32.totalorder %s297, %s298
      %p310 = scmp.eq.s32.totalorder %s31, 1
      %p311 = por %p309, %p310
      %p313 = scmp.ne.s32.totalorder %s298, %s312
      %p314 = scmp.eq.s32.totalorder %s31, 0
      %p315 = por %p313, %p314
      %s317 = sadd.s32 %s316, 1
      %p320 = scmp.eq.s32.totalorder %s25, 1
      %p321 = scmp.ne.s32.totalorder %s316, %s318
      %p322 = scmp.eq.s32.totalorder %s25, 0
      %p323 = por %p321, %p322
      %p324 = scmp.ne.s32.totalorder %s316, %s318
      %p325 = scmp.eq.s32.totalorder %s30, 1
      %p326 = por %p324, %p325
      %p327 = scmp.ne.s32.totalorder %s318, %s319
      %p328 = scmp.eq.s32.totalorder %s30, 0
      %p329 = por %p327, %p328
      %p330 = scmp.ne.s32.totalorder %s318, %s319
      %p331 = scmp.eq.s32.totalorder %s31, 1
      %p332 = por %p330, %p331
      %p334 = scmp.ne.s32.totalorder %s319, %s333
      %p335 = scmp.eq.s32.totalorder %s31, 0
      %p336 = por %p334, %p335
      %s337 = ssub.s32 %s25, %s32
      %p338 = scmp.eq.s32.totalorder %s337, 0
      %s340 = sadd.s32 %s339, 1
      %s341 = scalar_select %p338, %s339, %s340
      %p344 = pneg %p338
      %p345 = scmp.eq.s32.totalorder %s25, 1
      %p346 = por %p344, %p345
      %p347 = scmp.ne.s32.totalorder %s339, %s342
      %p348 = scmp.eq.s32.totalorder %s25, 0
      %p349 = por %p347, %p348
      %p350 = scmp.ne.s32.totalorder %s339, %s342
      %p351 = scmp.eq.s32.totalorder %s30, 1
      %p352 = por %p350, %p351
      %p353 = scmp.ne.s32.totalorder %s342, %s343
      %p354 = scmp.eq.s32.totalorder %s30, 0
      %p355 = por %p353, %p354
      %p356 = scmp.ne.s32.totalorder %s342, %s343
      %p357 = scmp.eq.s32.totalorder %s31, 1
      %p358 = por %p356, %p357
      %p360 = scmp.ne.s32.totalorder %s343, %s359
      %p361 = scmp.eq.s32.totalorder %s31, 0
      %p362 = por %p360, %p361
      %p363 = scmp.le.s32.totalorder 1, %s25
      %p364 = scmp.lt.s32.totalorder %s25, 3
      %p365 = pnand %p363, %p364
      %p366 = pneg %p365
      // Predicated region
      $region9: #{ncf_forward.1} parent=5 // pred_check
        _
      $region10: #{ncf_forward.1} parent=5 // pred_check_branch
        %368 = sbr.rel (%p365) target = $region12
      $region11: #{ncf_forward.1} parent=5 // pred_region
        %s369 = ssub.s32 %s25, 1
        // Predicated region
        $region13: #{ncf_forward.1} parent=11 // pred_check
          %p370 = pneg %p98
        $region14: #{ncf_forward.1} parent=11 // pred_check_branch
          %372 = sbr.rel (%p370) target = $region16
        $region15: #{ncf_forward.1} parent=11 // pred_region
          _
        $region16: #{ncf_forward.1} parent=11 // pred_fallthru
          _
        // Predicated region
        $region17: #{ncf_forward.1} parent=11 // pred_check
          %p373 = pneg %p119
        $region18: #{ncf_forward.1} parent=11 // pred_check_branch
          %375 = sbr.rel (%p373) target = $region20
        $region19: #{ncf_forward.1} parent=11 // pred_region
          _
        $region20: #{ncf_forward.1} parent=11 // pred_fallthru
          _
        // Predicated region
        $region21: #{ncf_forward.1} parent=11 // pred_check
          %p376 = pneg %p140
        $region22: #{ncf_forward.1} parent=11 // pred_check_branch
          %378 = sbr.rel (%p376) target = $region24
        $region23: #{ncf_forward.1} parent=11 // pred_region
          _
        $region24: #{ncf_forward.1} parent=11 // pred_fallthru
          _
        // Predicated region
        $region25: #{ncf_forward.1} parent=11 // pred_check
          %p379 = pneg %p161
        $region26: #{ncf_forward.1} parent=11 // pred_check_branch
          %381 = sbr.rel (%p379) target = $region28
        $region27: #{ncf_forward.1} parent=11 // pred_region
          _
        $region28: #{ncf_forward.1} parent=11 // pred_fallthru
          _
        // Predicated region
        $region29: #{ncf_forward.1} parent=11 // pred_check
          %p382 = pneg %p182
        $region30: #{ncf_forward.1} parent=11 // pred_check_branch
          %384 = sbr.rel (%p382) target = $region32
        $region31: #{ncf_forward.1} parent=11 // pred_region
          _
        $region32: #{ncf_forward.1} parent=11 // pred_fallthru
          _
        // Predicated region
        $region33: #{ncf_forward.1} parent=11 // pred_check
          %p385 = pneg %p203
        $region34: #{ncf_forward.1} parent=11 // pred_check_branch
          %387 = sbr.rel (%p385) target = $region36
        $region35: #{ncf_forward.1} parent=11 // pred_region
          _
        $region36: #{ncf_forward.1} parent=11 // pred_fallthru
          _
        // Predicated region
        $region37: #{ncf_forward.1} parent=11 // pred_check
          %p388 = pneg %p224
        $region38: #{ncf_forward.1} parent=11 // pred_check_branch
          %390 = sbr.rel (%p388) target = $region40
        $region39: #{ncf_forward.1} parent=11 // pred_region
          _
        $region40: #{ncf_forward.1} parent=11 // pred_fallthru
          _
        // Predicated region
        $region41: #{ncf_forward.1} parent=11 // pred_check
          %p391 = pneg %p245
        $region42: #{ncf_forward.1} parent=11 // pred_check_branch
          %393 = sbr.rel (%p391) target = $region44
        $region43: #{ncf_forward.1} parent=11 // pred_region
          _
        $region44: #{ncf_forward.1} parent=11 // pred_fallthru
          _
        // Predicated region
        $region45: #{ncf_forward.1} parent=11 // pred_check
          %p394 = pneg %p266
        $region46: #{ncf_forward.1} parent=11 // pred_check_branch
          %396 = sbr.rel (%p394) target = $region48
        $region47: #{ncf_forward.1} parent=11 // pred_region
          _
        $region48: #{ncf_forward.1} parent=11 // pred_fallthru
          _
        // Predicated region
        $region49: #{ncf_forward.1} parent=11 // pred_check
          %p397 = pneg %p287
        $region50: #{ncf_forward.1} parent=11 // pred_check_branch
          %399 = sbr.rel (%p397) target = $region52
        $region51: #{ncf_forward.1} parent=11 // pred_region
          _
        $region52: #{ncf_forward.1} parent=11 // pred_fallthru
          _
        // Predicated region
        $region53: #{ncf_forward.1} parent=11 // pred_check
          %p400 = pneg %p308
        $region54: #{ncf_forward.1} parent=11 // pred_check_branch
          %402 = sbr.rel (%p400) target = $region56
        $region55: #{ncf_forward.1} parent=11 // pred_region
          _
        $region56: #{ncf_forward.1} parent=11 // pred_fallthru
          _
        // Predicated region
        $region57: #{ncf_forward.1} parent=11 // pred_check
          %p403 = pneg %p329
        $region58: #{ncf_forward.1} parent=11 // pred_check_branch
          %405 = sbr.rel (%p403) target = $region60
        $region59: #{ncf_forward.1} parent=11 // pred_region
          _
        $region60: #{ncf_forward.1} parent=11 // pred_fallthru
          _
      $region12: #{ncf_forward.1} parent=5 // pred_fallthru
        _
      %p406 = scmp.lt.s32.totalorder %s25, 2
      // Predicated region
      $region61: #{ncf_forward.1} parent=5 // pred_check
        %p407 = pneg %p406
      $region62: #{ncf_forward.1} parent=5 // pred_check_branch
        %409 = sbr.rel (%p407) target = $region64
      $region63: #{ncf_forward.1} parent=5 // pred_region
        // Predicated region
        $region65: #{ncf_forward.1} parent=63 // pred_check
          %p410 = pneg %p45
        $region66: #{ncf_forward.1} parent=63 // pred_check_branch
          %412 = sbr.rel (%p410) target = $region68
        $region67: #{ncf_forward.1} parent=63 // pred_region
          %s413 = smul.u32 16, %s25
          %p414 = scmp.lt.s32.totalorder %s413, 31
          %s415 = scalar_select %p414, %s413, 31
          %s416 = smul.addr %s415, 8
          %s417 = scalar_lea.vmem %s0, %s416
          %s418 = smul.u32 16, %s25
        $region68: #{ncf_forward.1} parent=63 // pred_fallthru
          _
        // Predicated region
        $region69: #{ncf_forward.1} parent=63 // pred_check
          %p419 = pneg %p71
        $region70: #{ncf_forward.1} parent=63 // pred_check_branch
          %421 = sbr.rel (%p419) target = $region72
        $region71: #{ncf_forward.1} parent=63 // pred_region
          %s422 = smul.u32 16, %s25
          %p423 = scmp.lt.s32.totalorder %s422, 31
          %s424 = scalar_select %p423, %s422, 31
          %s425 = smul.addr %s424, 8
          %s426 = scalar_lea.vmem %s1, %s425
          %s427 = smul.u32 16, %s25
        $region72: #{ncf_forward.1} parent=63 // pred_fallthru
          _
      $region64: #{ncf_forward.1} parent=5 // pred_fallthru
        _
      %p428 = scmp.le.s32.totalorder 1, %s25
      %p429 = scmp.lt.s32.totalorder %s25, 3
      %p430 = pnand %p428, %p429
      %p431 = pneg %p430
      // Predicated region
      $region73: #{ncf_forward.1} parent=5 // pred_check
        _
      $region74: #{ncf_forward.1} parent=5 // pred_check_branch
        %433 = sbr.rel (%p430) target = $region76
      $region75: #{ncf_forward.1} parent=5 // pred_region
        %s434 = ssub.s32 %s25, 1
        %s435 = smul.u32 16, %s30
        %p436 = scmp.lt.s32.totalorder %s435, 31
        %s437 = scalar_select %p436, %s435, 31
        %s438 = smul.addr %s437, 8
        %s439 = scalar_lea.vmem %s0, %s438
        %p440 = pneg %p51
        %p441 = pneg %p48
        %s442 = smul.u32 16, %s30
        %p443 = scmp.lt.s32.totalorder %s442, 31
        %s444 = scalar_select %p443, %s442, 31
        %s445 = smul.addr %s444, 8
        %s446 = scalar_lea.vmem %s1, %s445
        %p447 = pneg %p77
        %p448 = pneg %p74
        %p449 = pneg %p98
        %p450 = pneg %p95
        %p451 = pneg %p119
        %p452 = pneg %p116
        %p453 = pneg %p140
        %p454 = pneg %p137
        %p455 = pneg %p161
        %p456 = pneg %p158
        %p457 = pneg %p182
        %p458 = pneg %p179
        %p459 = pneg %p203
        %p460 = pneg %p200
        %p461 = pneg %p224
        %p462 = pneg %p221
        %p463 = pneg %p245
        %p464 = pneg %p242
        %p465 = pneg %p266
        %p466 = pneg %p263
        %p467 = pneg %p287
        %p468 = pneg %p284
        %p469 = pneg %p308
        %p470 = pneg %p305
        %p471 = pneg %p329
        %p472 = pneg %p326
        %p473 = pneg %p355
        %p474 = pneg %p352
        %s475 = sand.u32 %s342, 1
        %s476 = scalar_lea.sflag [#allocation4], %s475
        %s477 = sand.u32 %s342, 1
        %s478 = scalar_lea.vmem [#allocation3], %s477
        %s479 = smul.u32 16, %s30
        %p480 = scmp.lt.s32.totalorder %s479, 31
        %s481 = scalar_select %p480, %s479, 31
        %s482 = smul.addr %s481, 8
        %s483 = scalar_lea.vmem %s0, %s482
        %s484 = smul.u32 16, %s30
        %s485 = smul.u32 16, %s30
        %p486 = scmp.lt.s32.totalorder %s485, 31
        %s487 = scalar_select %p486, %s485, 31
        %s488 = smul.addr %s487, 8
        %s489 = scalar_lea.vmem %s1, %s488
        %s490 = smul.u32 16, %s30
        %v491 = vld [vmem:[%s483] sm:$0xff]
        %v492 = vld [vmem:[%s483 + $0x8] sm:$0xff]
        %v493 = vld [vmem:[%s483 + $0x10] sm:$0xff]
        %v494 = vld [vmem:[%s483 + $0x18] sm:$0xff]
        %v495 = vld [vmem:[%s483 + $0x20] sm:$0xff]
        %v496 = vld [vmem:[%s483 + $0x28] sm:$0xff]
        %v497 = vld [vmem:[%s483 + $0x30] sm:$0xff]
        %v498 = vld [vmem:[%s483 + $0x38] sm:$0xff]
        %v499 = vld [vmem:[%s483 + $0x40] sm:$0xff]
        %v500 = vld [vmem:[%s483 + $0x48] sm:$0xff]
        %v501 = vld [vmem:[%s483 + $0x50] sm:$0xff]
        %v502 = vld [vmem:[%s483 + $0x58] sm:$0xff]
        %v503 = vld [vmem:[%s483 + $0x60] sm:$0xff]
        %v504 = vld [vmem:[%s483 + $0x68] sm:$0xff]
        %v505 = vld [vmem:[%s483 + $0x70] sm:$0xff]
        %v506 = vld [vmem:[%s483 + $0x78] sm:$0xff]
        %v507 = vld [vmem:[%s489] sm:$0xff]
        %v508 = vld [vmem:[%s489 + $0x8] sm:$0xff]
        %v509 = vld [vmem:[%s489 + $0x10] sm:$0xff]
        %v510 = vld [vmem:[%s489 + $0x18] sm:$0xff]
        %v511 = vld [vmem:[%s489 + $0x20] sm:$0xff]
        %v512 = vld [vmem:[%s489 + $0x28] sm:$0xff]
        %v513 = vld [vmem:[%s489 + $0x30] sm:$0xff]
        %v514 = vld [vmem:[%s489 + $0x38] sm:$0xff]
        %v515 = vld [vmem:[%s489 + $0x40] sm:$0xff]
        %v516 = vld [vmem:[%s489 + $0x48] sm:$0xff]
        %v517 = vld [vmem:[%s489 + $0x50] sm:$0xff]
        %v518 = vld [vmem:[%s489 + $0x58] sm:$0xff]
        %v519 = vld [vmem:[%s489 + $0x60] sm:$0xff]
        %v520 = vld [vmem:[%s489 + $0x68] sm:$0xff]
        %v521 = vld [vmem:[%s489 + $0x70] sm:$0xff]
        %v522 = vld [vmem:[%s489 + $0x78] sm:$0xff]
        %v523 = vlaneseq
        %v524 = vand.u32 %v523, 127
        %525 = vset.pattern.permute.xlu0 0
        %526 = vperm.xlu0 %525, %v491
        %v527 = vpop.permute.xlu0 %526
        %528 = vset.pattern.permute.xlu0 0
        %529 = vperm.xlu0 %528, %v492
        %v530 = vpop.permute.xlu0 %529
        %531 = vset.pattern.permute.xlu0 0
        %532 = vperm.xlu0 %531, %v493
        %v533 = vpop.permute.xlu0 %532
        %534 = vset.pattern.permute.xlu0 0
        %535 = vperm.xlu0 %534, %v494
        %v536 = vpop.permute.xlu0 %535
        %537 = vset.pattern.permute.xlu0 0
        %538 = vperm.xlu0 %537, %v495
        %v539 = vpop.permute.xlu0 %538
        %540 = vset.pattern.permute.xlu0 0
        %541 = vperm.xlu0 %540, %v496
        %v542 = vpop.permute.xlu0 %541
        %543 = vset.pattern.permute.xlu0 0
        %544 = vperm.xlu0 %543, %v497
        %v545 = vpop.permute.xlu0 %544
        %546 = vset.pattern.permute.xlu0 0
        %547 = vperm.xlu0 %546, %v498
        %v548 = vpop.permute.xlu0 %547
        %549 = vset.pattern.permute.xlu0 0
        %550 = vperm.xlu0 %549, %v499
        %v551 = vpop.permute.xlu0 %550
        %552 = vset.pattern.permute.xlu0 0
        %553 = vperm.xlu0 %552, %v500
        %v554 = vpop.permute.xlu0 %553
        %555 = vset.pattern.permute.xlu0 0
        %556 = vperm.xlu0 %555, %v501
        %v557 = vpop.permute.xlu0 %556
        %558 = vset.pattern.permute.xlu0 0
        %559 = vperm.xlu0 %558, %v502
        %v560 = vpop.permute.xlu0 %559
        %561 = vset.pattern.permute.xlu0 0
        %562 = vperm.xlu0 %561, %v503
        %v563 = vpop.permute.xlu0 %562
        %564 = vset.pattern.permute.xlu0 0
        %565 = vperm.xlu0 %564, %v504
        %v566 = vpop.permute.xlu0 %565
        %567 = vset.pattern.permute.xlu0 0
        %568 = vperm.xlu0 %567, %v505
        %v569 = vpop.permute.xlu0 %568
        %570 = vset.pattern.permute.xlu0 0
        %571 = vperm.xlu0 %570, %v506
        %v572 = vpop.permute.xlu0 %571
        %vm573 = vcmp.eq.s32.totalorder %v524, %v527
        %vm574 = vcmp.eq.s32.totalorder %v524, %v530
        %vm575 = vcmp.eq.s32.totalorder %v524, %v533
        %vm576 = vcmp.eq.s32.totalorder %v524, %v536
        %vm577 = vcmp.eq.s32.totalorder %v524, %v539
        %vm578 = vcmp.eq.s32.totalorder %v524, %v542
        %vm579 = vcmp.eq.s32.totalorder %v524, %v545
        %vm580 = vcmp.eq.s32.totalorder %v524, %v548
        %vm581 = vcmp.eq.s32.totalorder %v524, %v551
        %vm582 = vcmp.eq.s32.totalorder %v524, %v554
        %vm583 = vcmp.eq.s32.totalorder %v524, %v557
        %vm584 = vcmp.eq.s32.totalorder %v524, %v560
        %vm585 = vcmp.eq.s32.totalorder %v524, %v563
        %vm586 = vcmp.eq.s32.totalorder %v524, %v566
        %vm587 = vcmp.eq.s32.totalorder %v524, %v569
        %vm588 = vcmp.eq.s32.totalorder %v524, %v572
        %v589 = vsel %vm573, 1, 0
        %v590 = vsel %vm574, 1, 0
        %v591 = vsel %vm575, 1, 0
        %v592 = vsel %vm576, 1, 0
        %v593 = vsel %vm577, 1, 0
        %v594 = vsel %vm578, 1, 0
        %v595 = vsel %vm579, 1, 0
        %v596 = vsel %vm580, 1, 0
        %v597 = vsel %vm581, 1, 0
        %v598 = vsel %vm582, 1, 0
        %v599 = vsel %vm583, 1, 0
        %v600 = vsel %vm584, 1, 0
        %v601 = vsel %vm585, 1, 0
        %v602 = vsel %vm586, 1, 0
        %v603 = vsel %vm587, 1, 0
        %v604 = vsel %vm588, 1, 0
        %v605 = vcvt.s32.f32 %v589
        %v606 = vcvt.s32.f32 %v590
        %v607 = vcvt.s32.f32 %v591
        %v608 = vcvt.s32.f32 %v592
        %v609 = vcvt.s32.f32 %v593
        %v610 = vcvt.s32.f32 %v594
        %v611 = vcvt.s32.f32 %v595
        %v612 = vcvt.s32.f32 %v596
        %v613 = vcvt.s32.f32 %v597
        %v614 = vcvt.s32.f32 %v598
        %v615 = vcvt.s32.f32 %v599
        %v616 = vcvt.s32.f32 %v600
        %v617 = vcvt.s32.f32 %v601
        %v618 = vcvt.s32.f32 %v602
        %v619 = vcvt.s32.f32 %v603
        %v620 = vcvt.s32.f32 %v604
        %621 = vset.pattern.permute.xlu0 0
        %622 = vperm.xlu0 %621, %v507
        %v623 = vpop.permute.xlu0 %622
        %624 = vset.pattern.permute.xlu0 0
        %625 = vperm.xlu0 %624, %v508
        %v626 = vpop.permute.xlu0 %625
        %627 = vset.pattern.permute.xlu0 0
        %628 = vperm.xlu0 %627, %v509
        %v629 = vpop.permute.xlu0 %628
        %630 = vset.pattern.permute.xlu0 0
        %631 = vperm.xlu0 %630, %v510
        %v632 = vpop.permute.xlu0 %631
        %633 = vset.pattern.permute.xlu0 0
        %634 = vperm.xlu0 %633, %v511
        %v635 = vpop.permute.xlu0 %634
        %636 = vset.pattern.permute.xlu0 0
        %637 = vperm.xlu0 %636, %v512
        %v638 = vpop.permute.xlu0 %637
        %639 = vset.pattern.permute.xlu0 0
        %640 = vperm.xlu0 %639, %v513
        %v641 = vpop.permute.xlu0 %640
        %642 = vset.pattern.permute.xlu0 0
        %643 = vperm.xlu0 %642, %v514
        %v644 = vpop.permute.xlu0 %643
        %645 = vset.pattern.permute.xlu0 0
        %646 = vperm.xlu0 %645, %v515
        %v647 = vpop.permute.xlu0 %646
        %648 = vset.pattern.permute.xlu0 0
        %649 = vperm.xlu0 %648, %v516
        %v650 = vpop.permute.xlu0 %649
        %651 = vset.pattern.permute.xlu0 0
        %652 = vperm.xlu0 %651, %v517
        %v653 = vpop.permute.xlu0 %652
        %654 = vset.pattern.permute.xlu0 0
        %655 = vperm.xlu0 %654, %v518
        %v656 = vpop.permute.xlu0 %655
        %657 = vset.pattern.permute.xlu0 0
        %658 = vperm.xlu0 %657, %v519
        %v659 = vpop.permute.xlu0 %658
        %660 = vset.pattern.permute.xlu0 0
        %661 = vperm.xlu0 %660, %v520
        %v662 = vpop.permute.xlu0 %661
        %663 = vset.pattern.permute.xlu0 0
        %664 = vperm.xlu0 %663, %v521
        %v665 = vpop.permute.xlu0 %664
        %666 = vset.pattern.permute.xlu0 0
        %667 = vperm.xlu0 %666, %v522
        %v668 = vpop.permute.xlu0 %667
        %vm669 = vcmp.eq.s32.totalorder %v524, %v623
        %vm670 = vcmp.eq.s32.totalorder %v524, %v626
        %vm671 = vcmp.eq.s32.totalorder %v524, %v629
        %vm672 = vcmp.eq.s32.totalorder %v524, %v632
        %vm673 = vcmp.eq.s32.totalorder %v524, %v635
        %vm674 = vcmp.eq.s32.totalorder %v524, %v638
        %vm675 = vcmp.eq.s32.totalorder %v524, %v641
        %vm676 = vcmp.eq.s32.totalorder %v524, %v644
        %vm677 = vcmp.eq.s32.totalorder %v524, %v647
        %vm678 = vcmp.eq.s32.totalorder %v524, %v650
        %vm679 = vcmp.eq.s32.totalorder %v524, %v653
        %vm680 = vcmp.eq.s32.totalorder %v524, %v656
        %vm681 = vcmp.eq.s32.totalorder %v524, %v659
        %vm682 = vcmp.eq.s32.totalorder %v524, %v662
        %vm683 = vcmp.eq.s32.totalorder %v524, %v665
        %vm684 = vcmp.eq.s32.totalorder %v524, %v668
        %v685 = vsel %vm669, 1, 0
        %v686 = vsel %vm670, 1, 0
        %v687 = vsel %vm671, 1, 0
        %v688 = vsel %vm672, 1, 0
        %v689 = vsel %vm673, 1, 0
        %v690 = vsel %vm674, 1, 0
        %v691 = vsel %vm675, 1, 0
        %v692 = vsel %vm676, 1, 0
        %v693 = vsel %vm677, 1, 0
        %v694 = vsel %vm678, 1, 0
        %v695 = vsel %vm679, 1, 0
        %v696 = vsel %vm680, 1, 0
        %v697 = vsel %vm681, 1, 0
        %v698 = vsel %vm682, 1, 0
        %v699 = vsel %vm683, 1, 0
        %v700 = vsel %vm684, 1, 0
        %v701 = vcvt.s32.f32 %v685
        %v702 = vcvt.s32.f32 %v686
        %v703 = vcvt.s32.f32 %v687
        %v704 = vcvt.s32.f32 %v688
        %v705 = vcvt.s32.f32 %v689
        %v706 = vcvt.s32.f32 %v690
        %v707 = vcvt.s32.f32 %v691
        %v708 = vcvt.s32.f32 %v692
        %v709 = vcvt.s32.f32 %v693
        %v710 = vcvt.s32.f32 %v694
        %v711 = vcvt.s32.f32 %v695
        %v712 = vcvt.s32.f32 %v696
        %v713 = vcvt.s32.f32 %v697
        %v714 = vcvt.s32.f32 %v698
        %v715 = vcvt.s32.f32 %v699
        %v716 = vcvt.s32.f32 %v700
        %v717 = vld [vmem:[%s2] sm:$0xff]
        %v718 = vld [vmem:[%s2 + $0x8] sm:$0xff]
        %v719 = vld [vmem:[%s2 + $0x10] sm:$0xff]
        %v720 = vld [vmem:[%s2 + $0x18] sm:$0xff]
        %vm721 = vcmask 261120
        %v723 = vsel %vm721, %v605, 0
        %v726 = vsel %vm721, %v606, 0
        %v729 = vsel %vm721, %v607, 0
        %v732 = vsel %vm721, %v608, 0
        %v735 = vsel %vm721, %v609, 0
        %v738 = vsel %vm721, %v610, 0
        %v741 = vsel %vm721, %v611, 0
        %v744 = vsel %vm721, %v612, 0
        %v747 = vsel %vm721, %v613, 0
        %v750 = vsel %vm721, %v614, 0
        %v753 = vsel %vm721, %v615, 0
        %v756 = vsel %vm721, %v616, 0
        %v759 = vsel %vm721, %v617, 0
        %v762 = vsel %vm721, %v618, 0
        %v765 = vsel %vm721, %v619, 0
        %v768 = vsel %vm721, %v620, 0
        %770 = vmatprep.subr.mxu0 0.0
        %771 = vmatpush1.msra.mxu0 %v717
        %772 = vmatprep.subr.mxu0 0.0
        %773 = vmatpush1.msra.mxu0 %v718
        %774 = vmatprep.subr.mxu0 0.0
        %775 = vmatpush1.msra.mxu0 %v719
        %776 = vmatprep.subr.mxu0 0.0
        %777 = vmatpush1.msra.mxu0 %v720
        %778 = vmatprep.subr.mxu0 0.0
        %779 = vmatpush1.msra.mxu0 0.0
        %780 = vmatprep.subr.mxu0 0.0
        %781 = vmatpush1.msra.mxu0 0.0
        %782 = vmatprep.subr.mxu0 0.0
        %783 = vmatpush1.msra.mxu0 0.0
        %784 = vmatprep.subr.mxu0 0.0
        %785 = vmatpush1.msra.mxu0 0.0
        %786 = vmatprep.subr.mxu0 0.0
        %787 = vmatpush1.msra.mxu0 0.0
        %788 = vmatprep.subr.mxu0 0.0
        %789 = vmatpush1.msra.mxu0 0.0
        %790 = vmatprep.subr.mxu0 0.0
        %791 = vmatpush1.msra.mxu0 0.0
        %792 = vmatprep.subr.mxu0 0.0
        %793 = vmatpush1.msra.mxu0 0.0
        %794 = vmatprep.subr.mxu0 0.0
        %795 = vmatpush1.msra.mxu0 0.0
        %796 = vmatprep.subr.mxu0 0.0
        %797 = vmatpush1.msra.mxu0 0.0
        %798 = vmatprep.subr.mxu0 0.0
        %799 = vmatpush1.msra.mxu0 0.0
        %800 = vmatprep.subr.mxu0 0.0
        %801 = vmatpush1.msra.mxu0 0.0
        %802 = vmatprep.subr.mxu0 0.0
        %803 = vmatpush1.msra.mxu0 0.0
        %804 = vmatprep.subr.mxu0 0.0
        %805 = vmatpush1.msra.mxu0 0.0
        %806 = vmatprep.subr.mxu0 0.0
        %807 = vmatpush1.msra.mxu0 0.0
        %808 = vmatprep.subr.mxu0 0.0
        %809 = vmatpush1.msra.mxu0 0.0
        %810 = vmatprep.subr.mxu0 0.0
        %811 = vmatpush1.msra.mxu0 0.0
        %812 = vmatprep.subr.mxu0 0.0
        %813 = vmatpush1.msra.mxu0 0.0
        %814 = vmatprep.subr.mxu0 0.0
        %815 = vmatpush1.msra.mxu0 0.0
        %816 = vmatprep.subr.mxu0 0.0
        %817 = vmatpush1.msra.mxu0 0.0
        %818 = vmatprep.subr.mxu0 0.0
        %819 = vmatpush1.msra.mxu0 0.0
        %820 = vmatprep.subr.mxu0 0.0
        %821 = vmatpush1.msra.mxu0 0.0
        %822 = vmatprep.subr.mxu0 0.0
        %823 = vmatpush1.msra.mxu0 0.0
        %824 = vmatprep.subr.mxu0 0.0
        %825 = vmatpush1.msra.mxu0 0.0
        %826 = vmatprep.subr.mxu0 0.0
        %827 = vmatpush1.msra.mxu0 0.0
        %828 = vmatprep.subr.mxu0 0.0
        %829 = vmatpush1.msra.mxu0 0.0
        %830 = vmatprep.subr.mxu0 0.0
        %831 = vmatpush1.msra.mxu0 0.0
        %832 = vmatprep.subr.mxu0 0.0
        %833 = vmatpush1.msra.mxu0 0.0
        %834 = vmatprep.mubr.f32.mxu0 0.0
        %835 = vmatmul.mubr.f32.gmra.mrb[0].mxu0 %v723
        %v836 = vpop.f32.mrb[0].mxu0
        %v837 = vadd.f32 0.0, %v836
        %v838 = vpop.f32.mrb[0].mxu0
        %839 = vmatprep.mubr.f32.mxu0 0.0
        %840 = vmatmul.mubr.f32.gmra.mrb[0].mxu0 %v726
        %v841 = vpop.f32.mrb[0].mxu0
        %v842 = vadd.f32 0.0, %v841
        %v843 = vpop.f32.mrb[0].mxu0
        %844 = vmatprep.mubr.f32.mxu0 0.0
        %845 = vmatmul.mubr.f32.gmra.mrb[0].mxu0 %v729
        %v846 = vpop.f32.mrb[0].mxu0
        %v847 = vadd.f32 0.0, %v846
        %v848 = vpop.f32.mrb[0].mxu0
        %849 = vmatprep.mubr.f32.mxu0 0.0
        %850 = vmatmul.mubr.f32.gmra.mrb[0].mxu0 %v732
        %v851 = vpop.f32.mrb[0].mxu0
        %v852 = vadd.f32 0.0, %v851
        %v853 = vpop.f32.mrb[0].mxu0
        %854 = vmatprep.mubr.f32.mxu0 0.0
        %855 = vmatmul.mubr.f32.gmra.mrb[0].mxu0 %v735
        %v856 = vpop.f32.mrb[0].mxu0
        %v857 = vadd.f32 0.0, %v856
        %v858 = vpop.f32.mrb[0].mxu0
        %859 = vmatprep.mubr.f32.mxu0 0.0
        %860 = vmatmul.mubr.f32.gmra.mrb[0].mxu0 %v738
        %v861 = vpop.f32.mrb[0].mxu0
        %v862 = vadd.f32 0.0, %v861
        %v863 = vpop.f32.mrb[0].mxu0
        %864 = vmatprep.mubr.f32.mxu0 0.0
        %865 = vmatmul.mubr.f32.gmra.mrb[0].mxu0 %v741
        %v866 = vpop.f32.mrb[0].mxu0
        %v867 = vadd.f32 0.0, %v866
        %v868 = vpop.f32.mrb[0].mxu0
        %869 = vmatprep.mubr.f32.mxu0 0.0
        %870 = vmatmul.mubr.f32.gmra.mrb[0].mxu0 %v744
        %v871 = vpop.f32.mrb[0].mxu0
        %v872 = vadd.f32 0.0, %v871
        %v873 = vpop.f32.mrb[0].mxu0
        %874 = vmatprep.mubr.f32.mxu0 0.0
        %875 = vmatmul.mubr.f32.gmra.mrb[0].mxu0 %v747
        %v876 = vpop.f32.mrb[0].mxu0
        %v877 = vadd.f32 0.0, %v876
        %v878 = vpop.f32.mrb[0].mxu0
        %879 = vmatprep.mubr.f32.mxu0 0.0
        %880 = vmatmul.mubr.f32.gmra.mrb[0].mxu0 %v750
        %v881 = vpop.f32.mrb[0].mxu0
        %v882 = vadd.f32 0.0, %v881
        %v883 = vpop.f32.mrb[0].mxu0
        %884 = vmatprep.mubr.f32.mxu0 0.0
        %885 = vmatmul.mubr.f32.gmra.mrb[0].mxu0 %v753
        %v886 = vpop.f32.mrb[0].mxu0
        %v887 = vadd.f32 0.0, %v886
        %v888 = vpop.f32.mrb[0].mxu0
        %889 = vmatprep.mubr.f32.mxu0 0.0
        %890 = vmatmul.mubr.f32.gmra.mrb[0].mxu0 %v756
        %v891 = vpop.f32.mrb[0].mxu0
        %v892 = vadd.f32 0.0, %v891
        %v893 = vpop.f32.mrb[0].mxu0
        %894 = vmatprep.mubr.f32.mxu0 0.0
        %895 = vmatmul.mubr.f32.gmra.mrb[0].mxu0 %v759
        %v896 = vpop.f32.mrb[0].mxu0
        %v897 = vadd.f32 0.0, %v896
        %v898 = vpop.f32.mrb[0].mxu0
        %899 = vmatprep.mubr.f32.mxu0 0.0
        %900 = vmatmul.mubr.f32.gmra.mrb[0].mxu0 %v762
        %v901 = vpop.f32.mrb[0].mxu0
        %v902 = vadd.f32 0.0, %v901
        %v903 = vpop.f32.mrb[0].mxu0
        %904 = vmatprep.mubr.f32.mxu0 0.0
        %905 = vmatmul.mubr.f32.gmra.mrb[0].mxu0 %v765
        %v906 = vpop.f32.mrb[0].mxu0
        %v907 = vadd.f32 0.0, %v906
        %v908 = vpop.f32.mrb[0].mxu0
        %909 = vmatprep.mubr.f32.mxu0 0.0
        %910 = vmatmul.mubr.f32.gmra.mrb[0].mxu0 %v768
        %v911 = vpop.f32.mrb[0].mxu0
        %v912 = vadd.f32 0.0, %v911
        %v913 = vpop.f32.mrb[0].mxu0
        %914 = vdwg.mxu0
        %v915 = vld [vmem:[%s3] sm:$0xff]
        %v916 = vld [vmem:[%s3 + $0x8] sm:$0xff]
        %v917 = vld [vmem:[%s3 + $0x10] sm:$0xff]
        %v918 = vld [vmem:[%s3 + $0x18] sm:$0xff]
        %v919 = vld [vmem:[%s3 + $0x20] sm:$0xff]
        %v920 = vld [vmem:[%s3 + $0x28] sm:$0xff]
        %vm921 = vcmask 392192
        %v923 = vsel %vm921, %v701, 0
        %v926 = vsel %vm921, %v702, 0
        %v929 = vsel %vm921, %v703, 0
        %v932 = vsel %vm921, %v704, 0
        %v935 = vsel %vm921, %v705, 0
        %v938 = vsel %vm921, %v706, 0
        %v941 = vsel %vm921, %v707, 0
        %v944 = vsel %vm921, %v708, 0
        %v947 = vsel %vm921, %v709, 0
        %v950 = vsel %vm921, %v710, 0
        %v953 = vsel %vm921, %v711, 0
        %v956 = vsel %vm921, %v712, 0
        %v959 = vsel %vm921, %v713, 0
        %v962 = vsel %vm921, %v714, 0
        %v965 = vsel %vm921, %v715, 0
        %v968 = vsel %vm921, %v716, 0
        %970 = vmatprep.subr.mxu0 0.0
        %971 = vmatpush1.msra.mxu0 %v915
        %972 = vmatprep.subr.mxu0 0.0
        %973 = vmatpush1.msra.mxu0 %v916
        %974 = vmatprep.subr.mxu0 0.0
        %975 = vmatpush1.msra.mxu0 %v917
        %976 = vmatprep.subr.mxu0 0.0
        %977 = vmatpush1.msra.mxu0 %v918
        %978 = vmatprep.subr.mxu0 0.0
        %979 = vmatpush1.msra.mxu0 %v919
        %980 = vmatprep.subr.mxu0 0.0
        %981 = vmatpush1.msra.mxu0 %v920
        %982 = vmatprep.subr.mxu0 0.0
        %983 = vmatpush1.msra.mxu0 0.0
        %984 = vmatprep.subr.mxu0 0.0
        %985 = vmatpush1.msra.mxu0 0.0
        %986 = vmatprep.subr.mxu0 0.0
        %987 = vmatpush1.msra.mxu0 0.0
        %988 = vmatprep.subr.mxu0 0.0
        %989 = vmatpush1.msra.mxu0 0.0
        %990 = vmatprep.subr.mxu0 0.0
        %991 = vmatpush1.msra.mxu0 0.0
        %992 = vmatprep.subr.mxu0 0.0
        %993 = vmatpush1.msra.mxu0 0.0
        %994 = vmatprep.subr.mxu0 0.0
        %995 = vmatpush1.msra.mxu0 0.0
        %996 = vmatprep.subr.mxu0 0.0
        %997 = vmatpush1.msra.mxu0 0.0
        %998 = vmatprep.subr.mxu0 0.0
        %999 = vmatpush1.msra.mxu0 0.0
        %1000 = vmatprep.subr.mxu0 0.0
        %1001 = vmatpush1.msra.mxu0 0.0
        %1002 = vmatprep.subr.mxu0 0.0
        %1003 = vmatpush1.msra.mxu0 0.0
        %1004 = vmatprep.subr.mxu0 0.0
        %1005 = vmatpush1.msra.mxu0 0.0
        %1006 = vmatprep.subr.mxu0 0.0
        %1007 = vmatpush1.msra.mxu0 0.0
        %1008 = vmatprep.subr.mxu0 0.0
        %1009 = vmatpush1.msra.mxu0 0.0
        %1010 = vmatprep.subr.mxu0 0.0
        %1011 = vmatpush1.msra.mxu0 0.0
        %1012 = vmatprep.subr.mxu0 0.0
        %1013 = vmatpush1.msra.mxu0 0.0
        %1014 = vmatprep.subr.mxu0 0.0
        %1015 = vmatpush1.msra.mxu0 0.0
        %1016 = vmatprep.subr.mxu0 0.0
        %1017 = vmatpush1.msra.mxu0 0.0
        %1018 = vmatprep.subr.mxu0 0.0
        %1019 = vmatpush1.msra.mxu0 0.0
        %1020 = vmatprep.subr.mxu0 0.0
        %1021 = vmatpush1.msra.mxu0 0.0
        %1022 = vmatprep.subr.mxu0 0.0
        %1023 = vmatpush1.msra.mxu0 0.0
        %1024 = vmatprep.subr.mxu0 0.0
        %1025 = vmatpush1.msra.mxu0 0.0
        %1026 = vmatprep.subr.mxu0 0.0
        %1027 = vmatpush1.msra.mxu0 0.0
        %1028 = vmatprep.subr.mxu0 0.0
        %1029 = vmatpush1.msra.mxu0 0.0
        %1030 = vmatprep.subr.mxu0 0.0
        %1031 = vmatpush1.msra.mxu0 0.0
        %1032 = vmatprep.subr.mxu0 0.0
        %1033 = vmatpush1.msra.mxu0 0.0
        %1034 = vmatprep.mubr.f32.mxu0 0.0
        %1035 = vmatmul.mubr.f32.gmra.mrb[0].mxu0 %v923
        %v1036 = vpop.f32.mrb[0].mxu0
        %v1037 = vadd.f32 0.0, %v1036
        %v1038 = vpop.f32.mrb[0].mxu0
        %1039 = vmatprep.mubr.f32.mxu0 0.0
        %1040 = vmatmul.mubr.f32.gmra.mrb[0].mxu0 %v926
        %v1041 = vpop.f32.mrb[0].mxu0
        %v1042 = vadd.f32 0.0, %v1041
        %v1043 = vpop.f32.mrb[0].mxu0
        %1044 = vmatprep.mubr.f32.mxu0 0.0
        %1045 = vmatmul.mubr.f32.gmra.mrb[0].mxu0 %v929
        %v1046 = vpop.f32.mrb[0].mxu0
        %v1047 = vadd.f32 0.0, %v1046
        %v1048 = vpop.f32.mrb[0].mxu0
        %1049 = vmatprep.mubr.f32.mxu0 0.0
        %1050 = vmatmul.mubr.f32.gmra.mrb[0].mxu0 %v932
        %v1051 = vpop.f32.mrb[0].mxu0
        %v1052 = vadd.f32 0.0, %v1051
        %v1053 = vpop.f32.mrb[0].mxu0
        %1054 = vmatprep.mubr.f32.mxu0 0.0
        %1055 = vmatmul.mubr.f32.gmra.mrb[0].mxu0 %v935
        %v1056 = vpop.f32.mrb[0].mxu0
        %v1057 = vadd.f32 0.0, %v1056
        %v1058 = vpop.f32.mrb[0].mxu0
        %1059 = vmatprep.mubr.f32.mxu0 0.0
        %1060 = vmatmul.mubr.f32.gmra.mrb[0].mxu0 %v938
        %v1061 = vpop.f32.mrb[0].mxu0
        %v1062 = vadd.f32 0.0, %v1061
        %v1063 = vpop.f32.mrb[0].mxu0
        %1064 = vmatprep.mubr.f32.mxu0 0.0
        %1065 = vmatmul.mubr.f32.gmra.mrb[0].mxu0 %v941
        %v1066 = vpop.f32.mrb[0].mxu0
        %v1067 = vadd.f32 0.0, %v1066
        %v1068 = vpop.f32.mrb[0].mxu0
        %1069 = vmatprep.mubr.f32.mxu0 0.0
        %1070 = vmatmul.mubr.f32.gmra.mrb[0].mxu0 %v944
        %v1071 = vpop.f32.mrb[0].mxu0
        %v1072 = vadd.f32 0.0, %v1071
        %v1073 = vpop.f32.mrb[0].mxu0
        %1074 = vmatprep.mubr.f32.mxu0 0.0
        %1075 = vmatmul.mubr.f32.gmra.mrb[0].mxu0 %v947
        %v1076 = vpop.f32.mrb[0].mxu0
        %v1077 = vadd.f32 0.0, %v1076
        %v1078 = vpop.f32.mrb[0].mxu0
        %1079 = vmatprep.mubr.f32.mxu0 0.0
        %1080 = vmatmul.mubr.f32.gmra.mrb[0].mxu0 %v950
        %v1081 = vpop.f32.mrb[0].mxu0
        %v1082 = vadd.f32 0.0, %v1081
        %v1083 = vpop.f32.mrb[0].mxu0
        %1084 = vmatprep.mubr.f32.mxu0 0.0
        %1085 = vmatmul.mubr.f32.gmra.mrb[0].mxu0 %v953
        %v1086 = vpop.f32.mrb[0].mxu0
        %v1087 = vadd.f32 0.0, %v1086
        %v1088 = vpop.f32.mrb[0].mxu0
        %1089 = vmatprep.mubr.f32.mxu0 0.0
        %1090 = vmatmul.mubr.f32.gmra.mrb[0].mxu0 %v956
        %v1091 = vpop.f32.mrb[0].mxu0
        %v1092 = vadd.f32 0.0, %v1091
        %v1093 = vpop.f32.mrb[0].mxu0
        %1094 = vmatprep.mubr.f32.mxu0 0.0
        %1095 = vmatmul.mubr.f32.gmra.mrb[0].mxu0 %v959
        %v1096 = vpop.f32.mrb[0].mxu0
        %v1097 = vadd.f32 0.0, %v1096
        %v1098 = vpop.f32.mrb[0].mxu0
        %1099 = vmatprep.mubr.f32.mxu0 0.0
        %1100 = vmatmul.mubr.f32.gmra.mrb[0].mxu0 %v962
        %v1101 = vpop.f32.mrb[0].mxu0
        %v1102 = vadd.f32 0.0, %v1101
        %v1103 = vpop.f32.mrb[0].mxu0
        %1104 = vmatprep.mubr.f32.mxu0 0.0
        %1105 = vmatmul.mubr.f32.gmra.mrb[0].mxu0 %v965
        %v1106 = vpop.f32.mrb[0].mxu0
        %v1107 = vadd.f32 0.0, %v1106
        %v1108 = vpop.f32.mrb[0].mxu0
        %1109 = vmatprep.mubr.f32.mxu0 0.0
        %1110 = vmatmul.mubr.f32.gmra.mrb[0].mxu0 %v968
        %v1111 = vpop.f32.mrb[0].mxu0
        %v1112 = vadd.f32 0.0, %v1111
        %v1113 = vpop.f32.mrb[0].mxu0
        %1114 = vdwg.mxu0
        %v1115 = vmul.f32 %v837, %v1037
        %v1116 = vmul.f32 %v842, %v1042
        %v1117 = vmul.f32 %v847, %v1047
        %v1118 = vmul.f32 %v852, %v1052
        %v1119 = vmul.f32 %v857, %v1057
        %v1120 = vmul.f32 %v862, %v1062
        %v1121 = vmul.f32 %v867, %v1067
        %v1122 = vmul.f32 %v872, %v1072
        %v1123 = vmul.f32 %v877, %v1077
        %v1124 = vmul.f32 %v882, %v1082
        %v1125 = vmul.f32 %v887, %v1087
        %v1126 = vmul.f32 %v892, %v1092
        %v1127 = vmul.f32 %v897, %v1097
        %v1128 = vmul.f32 %v902, %v1102
        %v1129 = vmul.f32 %v907, %v1107
        %v1130 = vmul.f32 %v912, %v1112
        %v1131 = vld [vmem:[%s4] sm:$0xff]
        %v1132 = vld [vmem:[%s4 + $0x8] sm:$0xff]
        %v1133 = vld [vmem:[%s4 + $0x10] sm:$0xff]
        %v1134 = vld [vmem:[%s4 + $0x18] sm:$0xff]
        %v1135 = vld [vmem:[%s4 + $0x20] sm:$0xff]
        %v1136 = vld [vmem:[%s4 + $0x28] sm:$0xff]
        %v1137 = vld [vmem:[%s4 + $0x30] sm:$0xff]
        %v1138 = vld [vmem:[%s4 + $0x38] sm:$0xff]
        %v1139 = vld [vmem:[%s4 + $0x40] sm:$0xff]
        %v1140 = vld [vmem:[%s4 + $0x48] sm:$0xff]
        %v1141 = vld [vmem:[%s4 + $0x50] sm:$0xff]
        %v1142 = vld [vmem:[%s4 + $0x58] sm:$0xff]
        %v1143 = vld [vmem:[%s4 + $0x60] sm:$0xff]
        %v1144 = vld [vmem:[%s4 + $0x68] sm:$0xff]
        %v1145 = vld [vmem:[%s4 + $0x70] sm:$0xff]
        %v1146 = vld [vmem:[%s4 + $0x78] sm:$0xff]
        %v1147 = vld [vmem:[%s5] sm:$0xff]
        %v1148 = vld [vmem:[%s5 + $0x8] sm:$0xff]
        %v1149 = vld [vmem:[%s5 + $0x10] sm:$0xff]
        %v1150 = vld [vmem:[%s5 + $0x18] sm:$0xff]
        %v1151 = vld [vmem:[%s5 + $0x20] sm:$0xff]
        %v1152 = vld [vmem:[%s5 + $0x28] sm:$0xff]
        %v1153 = vld [vmem:[%s5 + $0x30] sm:$0xff]
        %v1154 = vld [vmem:[%s5 + $0x38] sm:$0xff]
        %v1155 = vld [vmem:[%s5 + $0x40] sm:$0xff]
        %v1156 = vld [vmem:[%s5 + $0x48] sm:$0xff]
        %v1157 = vld [vmem:[%s5 + $0x50] sm:$0xff]
        %v1158 = vld [vmem:[%s5 + $0x58] sm:$0xff]
        %v1159 = vld [vmem:[%s5 + $0x60] sm:$0xff]
        %v1160 = vld [vmem:[%s5 + $0x68] sm:$0xff]
        %v1161 = vld [vmem:[%s5 + $0x70] sm:$0xff]
        %v1162 = vld [vmem:[%s5 + $0x78] sm:$0xff]
        %1163 = vmatprep.subr.mxu0 0.0
        %1164 = vmatpush1.msra.mxu0 %v1147
        %1165 = vmatprep.subr.mxu0 0.0
        %1166 = vmatpush1.msra.mxu0 %v1148
        %1167 = vmatprep.subr.mxu0 0.0
        %1168 = vmatpush1.msra.mxu0 %v1149
        %1169 = vmatprep.subr.mxu0 0.0
        %1170 = vmatpush1.msra.mxu0 %v1150
        %1171 = vmatprep.subr.mxu0 0.0
        %1172 = vmatpush1.msra.mxu0 %v1151
        %1173 = vmatprep.subr.mxu0 0.0
        %1174 = vmatpush1.msra.mxu0 %v1152
        %1175 = vmatprep.subr.mxu0 0.0
        %1176 = vmatpush1.msra.mxu0 %v1153
        %1177 = vmatprep.subr.mxu0 0.0
        %1178 = vmatpush1.msra.mxu0 %v1154
        %1179 = vmatprep.subr.mxu0 0.0
        %1180 = vmatpush1.msra.mxu0 %v1155
        %1181 = vmatprep.subr.mxu0 0.0
        %1182 = vmatpush1.msra.mxu0 %v1156
        %1183 = vmatprep.subr.mxu0 0.0
        %1184 = vmatpush1.msra.mxu0 %v1157
        %1185 = vmatprep.subr.mxu0 0.0
        %1186 = vmatpush1.msra.mxu0 %v1158
        %1187 = vmatprep.subr.mxu0 0.0
        %1188 = vmatpush1.msra.mxu0 %v1159
        %1189 = vmatprep.subr.mxu0 0.0
        %1190 = vmatpush1.msra.mxu0 %v1160
        %1191 = vmatprep.subr.mxu0 0.0
        %1192 = vmatpush1.msra.mxu0 %v1161
        %1193 = vmatprep.subr.mxu0 0.0
        %1194 = vmatpush1.msra.mxu0 %v1162
        %1195 = vmatprep.subr.mxu0 0.0
        %1196 = vmatpush1.msra.mxu0 0.0
        %1197 = vmatprep.subr.mxu0 0.0
        %1198 = vmatpush1.msra.mxu0 0.0
        %1199 = vmatprep.subr.mxu0 0.0
        %1200 = vmatpush1.msra.mxu0 0.0
        %1201 = vmatprep.subr.mxu0 0.0
        %1202 = vmatpush1.msra.mxu0 0.0
        %1203 = vmatprep.subr.mxu0 0.0
        %1204 = vmatpush1.msra.mxu0 0.0
        %1205 = vmatprep.subr.mxu0 0.0
        %1206 = vmatpush1.msra.mxu0 0.0
        %1207 = vmatprep.subr.mxu0 0.0
        %1208 = vmatpush1.msra.mxu0 0.0
        %1209 = vmatprep.subr.mxu0 0.0
        %1210 = vmatpush1.msra.mxu0 0.0
        %1211 = vmatprep.subr.mxu0 0.0
        %1212 = vmatpush1.msra.mxu0 0.0
        %1213 = vmatprep.subr.mxu0 0.0
        %1214 = vmatpush1.msra.mxu0 0.0
        %1215 = vmatprep.subr.mxu0 0.0
        %1216 = vmatpush1.msra.mxu0 0.0
        %1217 = vmatprep.subr.mxu0 0.0
        %1218 = vmatpush1.msra.mxu0 0.0
        %1219 = vmatprep.subr.mxu0 0.0
        %1220 = vmatpush1.msra.mxu0 0.0
        %1221 = vmatprep.subr.mxu0 0.0
        %1222 = vmatpush1.msra.mxu0 0.0
        %1223 = vmatprep.subr.mxu0 0.0
        %1224 = vmatpush1.msra.mxu0 0.0
        %1225 = vmatprep.subr.mxu0 0.0
        %1226 = vmatpush1.msra.mxu0 0.0
        %1227 = vmatprep.mubr.f32.mxu0 0.0
        %1228 = vmatmul.mubr.f32.gmra.mrb[0].mxu0 %v1037
        %v1229 = vpop.f32.mrb[0].mxu0
        %v1230 = vadd.f32 0.0, %v1229
        %v1231 = vpop.f32.mrb[0].mxu0
        %1232 = vmatprep.mubr.f32.mxu0 0.0
        %1233 = vmatmul.mubr.f32.gmra.mrb[0].mxu0 %v1042
        %v1234 = vpop.f32.mrb[0].mxu0
        %v1235 = vadd.f32 0.0, %v1234
        %v1236 = vpop.f32.mrb[0].mxu0
        %1237 = vmatprep.mubr.f32.mxu0 0.0
        %1238 = vmatmul.mubr.f32.gmra.mrb[0].mxu0 %v1047
        %v1239 = vpop.f32.mrb[0].mxu0
        %v1240 = vadd.f32 0.0, %v1239
        %v1241 = vpop.f32.mrb[0].mxu0
        %1242 = vmatprep.mubr.f32.mxu0 0.0
        %1243 = vmatmul.mubr.f32.gmra.mrb[0].mxu0 %v1052
        %v1244 = vpop.f32.mrb[0].mxu0
        %v1245 = vadd.f32 0.0, %v1244
        %v1246 = vpop.f32.mrb[0].mxu0
        %1247 = vmatprep.mubr.f32.mxu0 0.0
        %1248 = vmatmul.mubr.f32.gmra.mrb[0].mxu0 %v1057
        %v1249 = vpop.f32.mrb[0].mxu0
        %v1250 = vadd.f32 0.0, %v1249
        %v1251 = vpop.f32.mrb[0].mxu0
        %1252 = vmatprep.mubr.f32.mxu0 0.0
        %1253 = vmatmul.mubr.f32.gmra.mrb[0].mxu0 %v1062
        %v1254 = vpop.f32.mrb[0].mxu0
        %v1255 = vadd.f32 0.0, %v1254
        %v1256 = vpop.f32.mrb[0].mxu0
        %1257 = vmatprep.mubr.f32.mxu0 0.0
        %1258 = vmatmul.mubr.f32.gmra.mrb[0].mxu0 %v1067
        %v1259 = vpop.f32.mrb[0].mxu0
        %v1260 = vadd.f32 0.0, %v1259
        %v1261 = vpop.f32.mrb[0].mxu0
        %1262 = vmatprep.mubr.f32.mxu0 0.0
        %1263 = vmatmul.mubr.f32.gmra.mrb[0].mxu0 %v1072
        %v1264 = vpop.f32.mrb[0].mxu0
        %v1265 = vadd.f32 0.0, %v1264
        %v1266 = vpop.f32.mrb[0].mxu0
        %1267 = vmatprep.mubr.f32.mxu0 0.0
        %1268 = vmatmul.mubr.f32.gmra.mrb[0].mxu0 %v1077
        %v1269 = vpop.f32.mrb[0].mxu0
        %v1270 = vadd.f32 0.0, %v1269
        %v1271 = vpop.f32.mrb[0].mxu0
        %1272 = vmatprep.mubr.f32.mxu0 0.0
        %1273 = vmatmul.mubr.f32.gmra.mrb[0].mxu0 %v1082
        %v1274 = vpop.f32.mrb[0].mxu0
        %v1275 = vadd.f32 0.0, %v1274
        %v1276 = vpop.f32.mrb[0].mxu0
        %1277 = vmatprep.mubr.f32.mxu0 0.0
        %1278 = vmatmul.mubr.f32.gmra.mrb[0].mxu0 %v1087
        %v1279 = vpop.f32.mrb[0].mxu0
        %v1280 = vadd.f32 0.0, %v1279
        %v1281 = vpop.f32.mrb[0].mxu0
        %1282 = vmatprep.mubr.f32.mxu0 0.0
        %1283 = vmatmul.mubr.f32.gmra.mrb[0].mxu0 %v1092
        %v1284 = vpop.f32.mrb[0].mxu0
        %v1285 = vadd.f32 0.0, %v1284
        %v1286 = vpop.f32.mrb[0].mxu0
        %1287 = vmatprep.mubr.f32.mxu0 0.0
        %1288 = vmatmul.mubr.f32.gmra.mrb[0].mxu0 %v1097
        %v1289 = vpop.f32.mrb[0].mxu0
        %v1290 = vadd.f32 0.0, %v1289
        %v1291 = vpop.f32.mrb[0].mxu0
        %1292 = vmatprep.mubr.f32.mxu0 0.0
        %1293 = vmatmul.mubr.f32.gmra.mrb[0].mxu0 %v1102
        %v1294 = vpop.f32.mrb[0].mxu0
        %v1295 = vadd.f32 0.0, %v1294
        %v1296 = vpop.f32.mrb[0].mxu0
        %1297 = vmatprep.mubr.f32.mxu0 0.0
        %1298 = vmatmul.mubr.f32.gmra.mrb[0].mxu0 %v1107
        %v1299 = vpop.f32.mrb[0].mxu0
        %v1300 = vadd.f32 0.0, %v1299
        %v1301 = vpop.f32.mrb[0].mxu0
        %1302 = vmatprep.mubr.f32.mxu0 0.0
        %1303 = vmatmul.mubr.f32.gmra.mrb[0].mxu0 %v1112
        %v1304 = vpop.f32.mrb[0].mxu0
        %v1305 = vadd.f32 0.0, %v1304
        %v1306 = vpop.f32.mrb[0].mxu0
        %1307 = vdwg.mxu0
        %1308 = vmatprep.subr.mxu0 0.0
        %1309 = vmatpush1.msra.mxu0 %v1131
        %1310 = vmatprep.subr.mxu0 0.0
        %1311 = vmatpush1.msra.mxu0 %v1132
        %1312 = vmatprep.subr.mxu0 0.0
        %1313 = vmatpush1.msra.mxu0 %v1133
        %1314 = vmatprep.subr.mxu0 0.0
        %1315 = vmatpush1.msra.mxu0 %v1134
        %1316 = vmatprep.subr.mxu0 0.0
        %1317 = vmatpush1.msra.mxu0 %v1135
        %1318 = vmatprep.subr.mxu0 0.0
        %1319 = vmatpush1.msra.mxu0 %v1136
        %1320 = vmatprep.subr.mxu0 0.0
        %1321 = vmatpush1.msra.mxu0 %v1137
        %1322 = vmatprep.subr.mxu0 0.0
        %1323 = vmatpush1.msra.mxu0 %v1138
        %1324 = vmatprep.subr.mxu0 0.0
        %1325 = vmatpush1.msra.mxu0 %v1139
        %1326 = vmatprep.subr.mxu0 0.0
        %1327 = vmatpush1.msra.mxu0 %v1140
        %1328 = vmatprep.subr.mxu0 0.0
        %1329 = vmatpush1.msra.mxu0 %v1141
        %1330 = vmatprep.subr.mxu0 0.0
        %1331 = vmatpush1.msra.mxu0 %v1142
        %1332 = vmatprep.subr.mxu0 0.0
        %1333 = vmatpush1.msra.mxu0 %v1143
        %1334 = vmatprep.subr.mxu0 0.0
        %1335 = vmatpush1.msra.mxu0 %v1144
        %1336 = vmatprep.subr.mxu0 0.0
        %1337 = vmatpush1.msra.mxu0 %v1145
        %1338 = vmatprep.subr.mxu0 0.0
        %1339 = vmatpush1.msra.mxu0 %v1146
        %1340 = vmatprep.subr.mxu0 0.0
        %1341 = vmatpush1.msra.mxu0 0.0
        %1342 = vmatprep.subr.mxu0 0.0
        %1343 = vmatpush1.msra.mxu0 0.0
        %1344 = vmatprep.subr.mxu0 0.0
        %1345 = vmatpush1.msra.mxu0 0.0
        %1346 = vmatprep.subr.mxu0 0.0
        %1347 = vmatpush1.msra.mxu0 0.0
        %1348 = vmatprep.subr.mxu0 0.0
        %1349 = vmatpush1.msra.mxu0 0.0
        %1350 = vmatprep.subr.mxu0 0.0
        %1351 = vmatpush1.msra.mxu0 0.0
        %1352 = vmatprep.subr.mxu0 0.0
        %1353 = vmatpush1.msra.mxu0 0.0
        %1354 = vmatprep.subr.mxu0 0.0
        %1355 = vmatpush1.msra.mxu0 0.0
        %1356 = vmatprep.subr.mxu0 0.0
        %1357 = vmatpush1.msra.mxu0 0.0
        %1358 = vmatprep.subr.mxu0 0.0
        %1359 = vmatpush1.msra.mxu0 0.0
        %1360 = vmatprep.subr.mxu0 0.0
        %1361 = vmatpush1.msra.mxu0 0.0
        %1362 = vmatprep.subr.mxu0 0.0
        %1363 = vmatpush1.msra.mxu0 0.0
        %1364 = vmatprep.subr.mxu0 0.0
        %1365 = vmatpush1.msra.mxu0 0.0
        %1366 = vmatprep.subr.mxu0 0.0
        %1367 = vmatpush1.msra.mxu0 0.0
        %1368 = vmatprep.subr.mxu0 0.0
        %1369 = vmatpush1.msra.mxu0 0.0
        %1370 = vmatprep.subr.mxu0 0.0
        %1371 = vmatpush1.msra.mxu0 0.0
        %1372 = vmatprep.mubr.f32.mxu0 0.0
        %1373 = vmatmul.mubr.f32.gmra.mrb[0].mxu0 %v837
        %v1374 = vpop.f32.mrb[0].mxu0
        %v1375 = vadd.f32 %v1230, %v1374
        %v1376 = vpop.f32.mrb[0].mxu0
        %1377 = vmatprep.mubr.f32.mxu0 0.0
        %1378 = vmatmul.mubr.f32.gmra.mrb[0].mxu0 %v842
        %v1379 = vpop.f32.mrb[0].mxu0
        %v1380 = vadd.f32 %v1235, %v1379
        %v1381 = vpop.f32.mrb[0].mxu0
        %1382 = vmatprep.mubr.f32.mxu0 0.0
        %1383 = vmatmul.mubr.f32.gmra.mrb[0].mxu0 %v847
        %v1384 = vpop.f32.mrb[0].mxu0
        %v1385 = vadd.f32 %v1240, %v1384
        %v1386 = vpop.f32.mrb[0].mxu0
        %1387 = vmatprep.mubr.f32.mxu0 0.0
        %1388 = vmatmul.mubr.f32.gmra.mrb[0].mxu0 %v852
        %v1389 = vpop.f32.mrb[0].mxu0
        %v1390 = vadd.f32 %v1245, %v1389
        %v1391 = vpop.f32.mrb[0].mxu0
        %1392 = vmatprep.mubr.f32.mxu0 0.0
        %1393 = vmatmul.mubr.f32.gmra.mrb[0].mxu0 %v857
        %v1394 = vpop.f32.mrb[0].mxu0
        %v1395 = vadd.f32 %v1250, %v1394
        %v1396 = vpop.f32.mrb[0].mxu0
        %1397 = vmatprep.mubr.f32.mxu0 0.0
        %1398 = vmatmul.mubr.f32.gmra.mrb[0].mxu0 %v862
        %v1399 = vpop.f32.mrb[0].mxu0
        %v1400 = vadd.f32 %v1255, %v1399
        %v1401 = vpop.f32.mrb[0].mxu0
        %1402 = vmatprep.mubr.f32.mxu0 0.0
        %1403 = vmatmul.mubr.f32.gmra.mrb[0].mxu0 %v867
        %v1404 = vpop.f32.mrb[0].mxu0
        %v1405 = vadd.f32 %v1260, %v1404
        %v1406 = vpop.f32.mrb[0].mxu0
        %1407 = vmatprep.mubr.f32.mxu0 0.0
        %1408 = vmatmul.mubr.f32.gmra.mrb[0].mxu0 %v872
        %v1409 = vpop.f32.mrb[0].mxu0
        %v1410 = vadd.f32 %v1265, %v1409
        %v1411 = vpop.f32.mrb[0].mxu0
        %1412 = vmatprep.mubr.f32.mxu0 0.0
        %1413 = vmatmul.mubr.f32.gmra.mrb[0].mxu0 %v877
        %v1414 = vpop.f32.mrb[0].mxu0
        %v1415 = vadd.f32 %v1270, %v1414
        %v1416 = vpop.f32.mrb[0].mxu0
        %1417 = vmatprep.mubr.f32.mxu0 0.0
        %1418 = vmatmul.mubr.f32.gmra.mrb[0].mxu0 %v882
        %v1419 = vpop.f32.mrb[0].mxu0
        %v1420 = vadd.f32 %v1275, %v1419
        %v1421 = vpop.f32.mrb[0].mxu0
        %1422 = vmatprep.mubr.f32.mxu0 0.0
        %1423 = vmatmul.mubr.f32.gmra.mrb[0].mxu0 %v887
        %v1424 = vpop.f32.mrb[0].mxu0
        %v1425 = vadd.f32 %v1280, %v1424
        %v1426 = vpop.f32.mrb[0].mxu0
        %1427 = vmatprep.mubr.f32.mxu0 0.0
        %1428 = vmatmul.mubr.f32.gmra.mrb[0].mxu0 %v892
        %v1429 = vpop.f32.mrb[0].mxu0
        %v1430 = vadd.f32 %v1285, %v1429
        %v1431 = vpop.f32.mrb[0].mxu0
        %1432 = vmatprep.mubr.f32.mxu0 0.0
        %1433 = vmatmul.mubr.f32.gmra.mrb[0].mxu0 %v897
        %v1434 = vpop.f32.mrb[0].mxu0
        %v1435 = vadd.f32 %v1290, %v1434
        %v1436 = vpop.f32.mrb[0].mxu0
        %1437 = vmatprep.mubr.f32.mxu0 0.0
        %1438 = vmatmul.mubr.f32.gmra.mrb[0].mxu0 %v902
        %v1439 = vpop.f32.mrb[0].mxu0
        %v1440 = vadd.f32 %v1295, %v1439
        %v1441 = vpop.f32.mrb[0].mxu0
        %1442 = vmatprep.mubr.f32.mxu0 0.0
        %1443 = vmatmul.mubr.f32.gmra.mrb[0].mxu0 %v907
        %v1444 = vpop.f32.mrb[0].mxu0
        %v1445 = vadd.f32 %v1300, %v1444
        %v1446 = vpop.f32.mrb[0].mxu0
        %1447 = vmatprep.mubr.f32.mxu0 0.0
        %1448 = vmatmul.mubr.f32.gmra.mrb[0].mxu0 %v912
        %v1449 = vpop.f32.mrb[0].mxu0
        %v1450 = vadd.f32 %v1305, %v1449
        %v1451 = vpop.f32.mrb[0].mxu0
        %1452 = vdwg.mxu0
        %v1453 = vld [vmem:[%s6] sm:$0x1]
        %v1455 = vlaneseq
        %v1456 = vshrl.u32 %v1455, 7
        %v1457 = vsub.s32 0, %v1456
        %v1458 = vrot.slane %v1453, %v1457
        %v1460 = vadd.f32 %v1375, %v1458
        %v1461 = vadd.f32 %v1380, %v1458
        %v1462 = vadd.f32 %v1385, %v1458
        %v1463 = vadd.f32 %v1390, %v1458
        %v1464 = vadd.f32 %v1395, %v1458
        %v1465 = vadd.f32 %v1400, %v1458
        %v1466 = vadd.f32 %v1405, %v1458
        %v1467 = vadd.f32 %v1410, %v1458
        %v1468 = vadd.f32 %v1415, %v1458
        %v1469 = vadd.f32 %v1420, %v1458
        %v1470 = vadd.f32 %v1425, %v1458
        %v1471 = vadd.f32 %v1430, %v1458
        %v1472 = vadd.f32 %v1435, %v1458
        %v1473 = vadd.f32 %v1440, %v1458
        %v1474 = vadd.f32 %v1445, %v1458
        %v1475 = vadd.f32 %v1450, %v1458
        %v1476 = vmax.f32 %v1460, 0.0
        %v1477 = vmax.f32 %v1461, 0.0
        %v1478 = vmax.f32 %v1462, 0.0
        %v1479 = vmax.f32 %v1463, 0.0
        %v1480 = vmax.f32 %v1464, 0.0
        %v1481 = vmax.f32 %v1465, 0.0
        %v1482 = vmax.f32 %v1466, 0.0
        %v1483 = vmax.f32 %v1467, 0.0
        %v1484 = vmax.f32 %v1468, 0.0
        %v1485 = vmax.f32 %v1469, 0.0
        %v1486 = vmax.f32 %v1470, 0.0
        %v1487 = vmax.f32 %v1471, 0.0
        %v1488 = vmax.f32 %v1472, 0.0
        %v1489 = vmax.f32 %v1473, 0.0
        %v1490 = vmax.f32 %v1474, 0.0
        %v1491 = vmax.f32 %v1475, 0.0
        %v1492 = vld [vmem:[%s7] sm:$0xff]
        %v1493 = vld [vmem:[%s7 + $0x8] sm:$0xff]
        %v1494 = vld [vmem:[%s7 + $0x10] sm:$0xff]
        %v1495 = vld [vmem:[%s7 + $0x18] sm:$0xff]
        %v1496 = vld [vmem:[%s7 + $0x20] sm:$0xff]
        %v1497 = vld [vmem:[%s7 + $0x28] sm:$0xff]
        %v1498 = vld [vmem:[%s7 + $0x30] sm:$0xff]
        %v1499 = vld [vmem:[%s7 + $0x38] sm:$0xff]
        %v1500 = vld [vmem:[%s7 + $0x40] sm:$0xff]
        %v1501 = vld [vmem:[%s7 + $0x48] sm:$0xff]
        %v1502 = vld [vmem:[%s7 + $0x50] sm:$0xff]
        %v1503 = vld [vmem:[%s7 + $0x58] sm:$0xff]
        %v1504 = vld [vmem:[%s7 + $0x60] sm:$0xff]
        %v1505 = vld [vmem:[%s7 + $0x68] sm:$0xff]
        %v1506 = vld [vmem:[%s7 + $0x70] sm:$0xff]
        %v1507 = vld [vmem:[%s7 + $0x78] sm:$0xff]
        %v1508 = vld [vmem:[%s8] sm:$0x1]
        %v1510 = vlaneseq
        %v1511 = vshrl.u32 %v1510, 7
        %v1512 = vsub.s32 0, %v1511
        %v1513 = vrot.slane %v1508, %v1512
        %1515 = vmatprep.subr.mxu0 0.0
        %1516 = vmatpush1.msra.mxu0 %v1492
        %1517 = vmatprep.subr.mxu0 0.0
        %1518 = vmatpush1.msra.mxu0 %v1493
        %1519 = vmatprep.subr.mxu0 0.0
        %1520 = vmatpush1.msra.mxu0 %v1494
        %1521 = vmatprep.subr.mxu0 0.0
        %1522 = vmatpush1.msra.mxu0 %v1495
        %1523 = vmatprep.subr.mxu0 0.0
        %1524 = vmatpush1.msra.mxu0 %v1496
        %1525 = vmatprep.subr.mxu0 0.0
        %1526 = vmatpush1.msra.mxu0 %v1497
        %1527 = vmatprep.subr.mxu0 0.0
        %1528 = vmatpush1.msra.mxu0 %v1498
        %1529 = vmatprep.subr.mxu0 0.0
        %1530 = vmatpush1.msra.mxu0 %v1499
        %1531 = vmatprep.subr.mxu0 0.0
        %1532 = vmatpush1.msra.mxu0 %v1500
        %1533 = vmatprep.subr.mxu0 0.0
        %1534 = vmatpush1.msra.mxu0 %v1501
        %1535 = vmatprep.subr.mxu0 0.0
        %1536 = vmatpush1.msra.mxu0 %v1502
        %1537 = vmatprep.subr.mxu0 0.0
        %1538 = vmatpush1.msra.mxu0 %v1503
        %1539 = vmatprep.subr.mxu0 0.0
        %1540 = vmatpush1.msra.mxu0 %v1504
        %1541 = vmatprep.subr.mxu0 0.0
        %1542 = vmatpush1.msra.mxu0 %v1505
        %1543 = vmatprep.subr.mxu0 0.0
        %1544 = vmatpush1.msra.mxu0 %v1506
        %1545 = vmatprep.subr.mxu0 0.0
        %1546 = vmatpush1.msra.mxu0 %v1507
        %1547 = vmatprep.subr.mxu0 0.0
        %1548 = vmatpush1.msra.mxu0 0.0
        %1549 = vmatprep.subr.mxu0 0.0
        %1550 = vmatpush1.msra.mxu0 0.0
        %1551 = vmatprep.subr.mxu0 0.0
        %1552 = vmatpush1.msra.mxu0 0.0
        %1553 = vmatprep.subr.mxu0 0.0
        %1554 = vmatpush1.msra.mxu0 0.0
        %1555 = vmatprep.subr.mxu0 0.0
        %1556 = vmatpush1.msra.mxu0 0.0
        %1557 = vmatprep.subr.mxu0 0.0
        %1558 = vmatpush1.msra.mxu0 0.0
        %1559 = vmatprep.subr.mxu0 0.0
        %1560 = vmatpush1.msra.mxu0 0.0
        %1561 = vmatprep.subr.mxu0 0.0
        %1562 = vmatpush1.msra.mxu0 0.0
        %1563 = vmatprep.subr.mxu0 0.0
        %1564 = vmatpush1.msra.mxu0 0.0
        %1565 = vmatprep.subr.mxu0 0.0
        %1566 = vmatpush1.msra.mxu0 0.0
        %1567 = vmatprep.subr.mxu0 0.0
        %1568 = vmatpush1.msra.mxu0 0.0
        %1569 = vmatprep.subr.mxu0 0.0
        %1570 = vmatpush1.msra.mxu0 0.0
        %1571 = vmatprep.subr.mxu0 0.0
        %1572 = vmatpush1.msra.mxu0 0.0
        %1573 = vmatprep.subr.mxu0 0.0
        %1574 = vmatpush1.msra.mxu0 0.0
        %1575 = vmatprep.subr.mxu0 0.0
        %1576 = vmatpush1.msra.mxu0 0.0
        %1577 = vmatprep.subr.mxu0 0.0
        %1578 = vmatpush1.msra.mxu0 0.0
        %1579 = vmatprep.mubr.f32.mxu0 0.0
        %1580 = vmatmul.mubr.f32.gmra.mrb[0].mxu0 %v1476
        %v1581 = vpop.f32.mrb[0].mxu0
        %v1582 = vadd.f32 %v1513, %v1581
        %v1583 = vpop.f32.mrb[0].mxu0
        %1584 = vmatprep.mubr.f32.mxu0 0.0
        %1585 = vmatmul.mubr.f32.gmra.mrb[0].mxu0 %v1477
        %v1586 = vpop.f32.mrb[0].mxu0
        %v1587 = vadd.f32 %v1513, %v1586
        %v1588 = vpop.f32.mrb[0].mxu0
        %1589 = vmatprep.mubr.f32.mxu0 0.0
        %1590 = vmatmul.mubr.f32.gmra.mrb[0].mxu0 %v1478
        %v1591 = vpop.f32.mrb[0].mxu0
        %v1592 = vadd.f32 %v1513, %v1591
        %v1593 = vpop.f32.mrb[0].mxu0
        %1594 = vmatprep.mubr.f32.mxu0 0.0
        %1595 = vmatmul.mubr.f32.gmra.mrb[0].mxu0 %v1479
        %v1596 = vpop.f32.mrb[0].mxu0
        %v1597 = vadd.f32 %v1513, %v1596
        %v1598 = vpop.f32.mrb[0].mxu0
        %1599 = vmatprep.mubr.f32.mxu0 0.0
        %1600 = vmatmul.mubr.f32.gmra.mrb[0].mxu0 %v1480
        %v1601 = vpop.f32.mrb[0].mxu0
        %v1602 = vadd.f32 %v1513, %v1601
        %v1603 = vpop.f32.mrb[0].mxu0
        %1604 = vmatprep.mubr.f32.mxu0 0.0
        %1605 = vmatmul.mubr.f32.gmra.mrb[0].mxu0 %v1481
        %v1606 = vpop.f32.mrb[0].mxu0
        %v1607 = vadd.f32 %v1513, %v1606
        %v1608 = vpop.f32.mrb[0].mxu0
        %1609 = vmatprep.mubr.f32.mxu0 0.0
        %1610 = vmatmul.mubr.f32.gmra.mrb[0].mxu0 %v1482
        %v1611 = vpop.f32.mrb[0].mxu0
        %v1612 = vadd.f32 %v1513, %v1611
        %v1613 = vpop.f32.mrb[0].mxu0
        %1614 = vmatprep.mubr.f32.mxu0 0.0
        %1615 = vmatmul.mubr.f32.gmra.mrb[0].mxu0 %v1483
        %v1616 = vpop.f32.mrb[0].mxu0
        %v1617 = vadd.f32 %v1513, %v1616
        %v1618 = vpop.f32.mrb[0].mxu0
        %1619 = vmatprep.mubr.f32.mxu0 0.0
        %1620 = vmatmul.mubr.f32.gmra.mrb[0].mxu0 %v1484
        %v1621 = vpop.f32.mrb[0].mxu0
        %v1622 = vadd.f32 %v1513, %v1621
        %v1623 = vpop.f32.mrb[0].mxu0
        %1624 = vmatprep.mubr.f32.mxu0 0.0
        %1625 = vmatmul.mubr.f32.gmra.mrb[0].mxu0 %v1485
        %v1626 = vpop.f32.mrb[0].mxu0
        %v1627 = vadd.f32 %v1513, %v1626
        %v1628 = vpop.f32.mrb[0].mxu0
        %1629 = vmatprep.mubr.f32.mxu0 0.0
        %1630 = vmatmul.mubr.f32.gmra.mrb[0].mxu0 %v1486
        %v1631 = vpop.f32.mrb[0].mxu0
        %v1632 = vadd.f32 %v1513, %v1631
        %v1633 = vpop.f32.mrb[0].mxu0
        %1634 = vmatprep.mubr.f32.mxu0 0.0
        %1635 = vmatmul.mubr.f32.gmra.mrb[0].mxu0 %v1487
        %v1636 = vpop.f32.mrb[0].mxu0
        %v1637 = vadd.f32 %v1513, %v1636
        %v1638 = vpop.f32.mrb[0].mxu0
        %1639 = vmatprep.mubr.f32.mxu0 0.0
        %1640 = vmatmul.mubr.f32.gmra.mrb[0].mxu0 %v1488
        %v1641 = vpop.f32.mrb[0].mxu0
        %v1642 = vadd.f32 %v1513, %v1641
        %v1643 = vpop.f32.mrb[0].mxu0
        %1644 = vmatprep.mubr.f32.mxu0 0.0
        %1645 = vmatmul.mubr.f32.gmra.mrb[0].mxu0 %v1489
        %v1646 = vpop.f32.mrb[0].mxu0
        %v1647 = vadd.f32 %v1513, %v1646
        %v1648 = vpop.f32.mrb[0].mxu0
        %1649 = vmatprep.mubr.f32.mxu0 0.0
        %1650 = vmatmul.mubr.f32.gmra.mrb[0].mxu0 %v1490
        %v1651 = vpop.f32.mrb[0].mxu0
        %v1652 = vadd.f32 %v1513, %v1651
        %v1653 = vpop.f32.mrb[0].mxu0
        %1654 = vmatprep.mubr.f32.mxu0 0.0
        %1655 = vmatmul.mubr.f32.gmra.mrb[0].mxu0 %v1491
        %v1656 = vpop.f32.mrb[0].mxu0
        %v1657 = vadd.f32 %v1513, %v1656
        %v1658 = vpop.f32.mrb[0].mxu0
        %1659 = vdwg.mxu0
        %v1660 = vmax.f32 %v1582, 0.0
        %v1661 = vmax.f32 %v1587, 0.0
        %v1662 = vmax.f32 %v1592, 0.0
        %v1663 = vmax.f32 %v1597, 0.0
        %v1664 = vmax.f32 %v1602, 0.0
        %v1665 = vmax.f32 %v1607, 0.0
        %v1666 = vmax.f32 %v1612, 0.0
        %v1667 = vmax.f32 %v1617, 0.0
        %v1668 = vmax.f32 %v1622, 0.0
        %v1669 = vmax.f32 %v1627, 0.0
        %v1670 = vmax.f32 %v1632, 0.0
        %v1671 = vmax.f32 %v1637, 0.0
        %v1672 = vmax.f32 %v1642, 0.0
        %v1673 = vmax.f32 %v1647, 0.0
        %v1674 = vmax.f32 %v1652, 0.0
        %v1675 = vmax.f32 %v1657, 0.0
        %v1676 = vld [vmem:[%s9] sm:$0xff]
        %v1677 = vld [vmem:[%s9 + $0x8] sm:$0xff]
        %v1678 = vld [vmem:[%s9 + $0x10] sm:$0xff]
        %v1679 = vld [vmem:[%s9 + $0x18] sm:$0xff]
        %v1680 = vld [vmem:[%s9 + $0x20] sm:$0xff]
        %v1681 = vld [vmem:[%s9 + $0x28] sm:$0xff]
        %v1682 = vld [vmem:[%s9 + $0x30] sm:$0xff]
        %v1683 = vld [vmem:[%s9 + $0x38] sm:$0xff]
        %v1684 = vld [vmem:[%s10] sm:$0x1]
        %v1686 = vlaneseq
        %v1687 = vshrl.u32 %v1686, 7
        %v1688 = vsub.s32 0, %v1687
        %v1689 = vrot.slane %v1684, %v1688
        %vm1691 = vcmask 523264
        %v1693 = vsel %vm1691, %v1660, 0
        %v1696 = vsel %vm1691, %v1661, 0
        %v1699 = vsel %vm1691, %v1662, 0
        %v1702 = vsel %vm1691, %v1663, 0
        %v1705 = vsel %vm1691, %v1664, 0
        %v1708 = vsel %vm1691, %v1665, 0
        %v1711 = vsel %vm1691, %v1666, 0
        %v1714 = vsel %vm1691, %v1667, 0
        %v1717 = vsel %vm1691, %v1668, 0
        %v1720 = vsel %vm1691, %v1669, 0
        %v1723 = vsel %vm1691, %v1670, 0
        %v1726 = vsel %vm1691, %v1671, 0
        %v1729 = vsel %vm1691, %v1672, 0
        %v1732 = vsel %vm1691, %v1673, 0
        %v1735 = vsel %vm1691, %v1674, 0
        %v1738 = vsel %vm1691, %v1675, 0
        %1740 = vmatprep.subr.mxu0 0.0
        %1741 = vmatpush1.msra.mxu0 %v1676
        %1742 = vmatprep.subr.mxu0 0.0
        %1743 = vmatpush1.msra.mxu0 %v1677
        %1744 = vmatprep.subr.mxu0 0.0
        %1745 = vmatpush1.msra.mxu0 %v1678
        %1746 = vmatprep.subr.mxu0 0.0
        %1747 = vmatpush1.msra.mxu0 %v1679
        %1748 = vmatprep.subr.mxu0 0.0
        %1749 = vmatpush1.msra.mxu0 %v1680
        %1750 = vmatprep.subr.mxu0 0.0
        %1751 = vmatpush1.msra.mxu0 %v1681
        %1752 = vmatprep.subr.mxu0 0.0
        %1753 = vmatpush1.msra.mxu0 %v1682
        %1754 = vmatprep.subr.mxu0 0.0
        %1755 = vmatpush1.msra.mxu0 %v1683
        %1756 = vmatprep.subr.mxu0 0.0
        %1757 = vmatpush1.msra.mxu0 0.0
        %1758 = vmatprep.subr.mxu0 0.0
        %1759 = vmatpush1.msra.mxu0 0.0
        %1760 = vmatprep.subr.mxu0 0.0
        %1761 = vmatpush1.msra.mxu0 0.0
        %1762 = vmatprep.subr.mxu0 0.0
        %1763 = vmatpush1.msra.mxu0 0.0
        %1764 = vmatprep.subr.mxu0 0.0
        %1765 = vmatpush1.msra.mxu0 0.0
        %1766 = vmatprep.subr.mxu0 0.0
        %1767 = vmatpush1.msra.mxu0 0.0
        %1768 = vmatprep.subr.mxu0 0.0
        %1769 = vmatpush1.msra.mxu0 0.0
        %1770 = vmatprep.subr.mxu0 0.0
        %1771 = vmatpush1.msra.mxu0 0.0
        %1772 = vmatprep.subr.mxu0 0.0
        %1773 = vmatpush1.msra.mxu0 0.0
        %1774 = vmatprep.subr.mxu0 0.0
        %1775 = vmatpush1.msra.mxu0 0.0
        %1776 = vmatprep.subr.mxu0 0.0
        %1777 = vmatpush1.msra.mxu0 0.0
        %1778 = vmatprep.subr.mxu0 0.0
        %1779 = vmatpush1.msra.mxu0 0.0
        %1780 = vmatprep.subr.mxu0 0.0
        %1781 = vmatpush1.msra.mxu0 0.0
        %1782 = vmatprep.subr.mxu0 0.0
        %1783 = vmatpush1.msra.mxu0 0.0
        %1784 = vmatprep.subr.mxu0 0.0
        %1785 = vmatpush1.msra.mxu0 0.0
        %1786 = vmatprep.subr.mxu0 0.0
        %1787 = vmatpush1.msra.mxu0 0.0
        %1788 = vmatprep.subr.mxu0 0.0
        %1789 = vmatpush1.msra.mxu0 0.0
        %1790 = vmatprep.subr.mxu0 0.0
        %1791 = vmatpush1.msra.mxu0 0.0
        %1792 = vmatprep.subr.mxu0 0.0
        %1793 = vmatpush1.msra.mxu0 0.0
        %1794 = vmatprep.subr.mxu0 0.0
        %1795 = vmatpush1.msra.mxu0 0.0
        %1796 = vmatprep.subr.mxu0 0.0
        %1797 = vmatpush1.msra.mxu0 0.0
        %1798 = vmatprep.subr.mxu0 0.0
        %1799 = vmatpush1.msra.mxu0 0.0
        %1800 = vmatprep.subr.mxu0 0.0
        %1801 = vmatpush1.msra.mxu0 0.0
        %1802 = vmatprep.subr.mxu0 0.0
        %1803 = vmatpush1.msra.mxu0 0.0
        %1804 = vmatprep.mubr.f32.mxu0 0.0
        %1805 = vmatmul.mubr.f32.gmra.mrb[0].mxu0 %v1693
        %v1806 = vpop.f32.mrb[0].mxu0
        %v1807 = vadd.f32 %v1689, %v1806
        %v1808 = vpop.f32.mrb[0].mxu0
        %1809 = vmatprep.mubr.f32.mxu0 0.0
        %1810 = vmatmul.mubr.f32.gmra.mrb[0].mxu0 %v1696
        %v1811 = vpop.f32.mrb[0].mxu0
        %v1812 = vadd.f32 %v1689, %v1811
        %v1813 = vpop.f32.mrb[0].mxu0
        %1814 = vmatprep.mubr.f32.mxu0 0.0
        %1815 = vmatmul.mubr.f32.gmra.mrb[0].mxu0 %v1699
        %v1816 = vpop.f32.mrb[0].mxu0
        %v1817 = vadd.f32 %v1689, %v1816
        %v1818 = vpop.f32.mrb[0].mxu0
        %1819 = vmatprep.mubr.f32.mxu0 0.0
        %1820 = vmatmul.mubr.f32.gmra.mrb[0].mxu0 %v1702
        %v1821 = vpop.f32.mrb[0].mxu0
        %v1822 = vadd.f32 %v1689, %v1821
        %v1823 = vpop.f32.mrb[0].mxu0
        %1824 = vmatprep.mubr.f32.mxu0 0.0
        %1825 = vmatmul.mubr.f32.gmra.mrb[0].mxu0 %v1705
        %v1826 = vpop.f32.mrb[0].mxu0
        %v1827 = vadd.f32 %v1689, %v1826
        %v1828 = vpop.f32.mrb[0].mxu0
        %1829 = vmatprep.mubr.f32.mxu0 0.0
        %1830 = vmatmul.mubr.f32.gmra.mrb[0].mxu0 %v1708
        %v1831 = vpop.f32.mrb[0].mxu0
        %v1832 = vadd.f32 %v1689, %v1831
        %v1833 = vpop.f32.mrb[0].mxu0
        %1834 = vmatprep.mubr.f32.mxu0 0.0
        %1835 = vmatmul.mubr.f32.gmra.mrb[0].mxu0 %v1711
        %v1836 = vpop.f32.mrb[0].mxu0
        %v1837 = vadd.f32 %v1689, %v1836
        %v1838 = vpop.f32.mrb[0].mxu0
        %1839 = vmatprep.mubr.f32.mxu0 0.0
        %1840 = vmatmul.mubr.f32.gmra.mrb[0].mxu0 %v1714
        %v1841 = vpop.f32.mrb[0].mxu0
        %v1842 = vadd.f32 %v1689, %v1841
        %v1843 = vpop.f32.mrb[0].mxu0
        %1844 = vmatprep.mubr.f32.mxu0 0.0
        %1845 = vmatmul.mubr.f32.gmra.mrb[0].mxu0 %v1717
        %v1846 = vpop.f32.mrb[0].mxu0
        %v1847 = vadd.f32 %v1689, %v1846
        %v1848 = vpop.f32.mrb[0].mxu0
        %1849 = vmatprep.mubr.f32.mxu0 0.0
        %1850 = vmatmul.mubr.f32.gmra.mrb[0].mxu0 %v1720
        %v1851 = vpop.f32.mrb[0].mxu0
        %v1852 = vadd.f32 %v1689, %v1851
        %v1853 = vpop.f32.mrb[0].mxu0
        %1854 = vmatprep.mubr.f32.mxu0 0.0
        %1855 = vmatmul.mubr.f32.gmra.mrb[0].mxu0 %v1723
        %v1856 = vpop.f32.mrb[0].mxu0
        %v1857 = vadd.f32 %v1689, %v1856
        %v1858 = vpop.f32.mrb[0].mxu0
        %1859 = vmatprep.mubr.f32.mxu0 0.0
        %1860 = vmatmul.mubr.f32.gmra.mrb[0].mxu0 %v1726
        %v1861 = vpop.f32.mrb[0].mxu0
        %v1862 = vadd.f32 %v1689, %v1861
        %v1863 = vpop.f32.mrb[0].mxu0
        %1864 = vmatprep.mubr.f32.mxu0 0.0
        %1865 = vmatmul.mubr.f32.gmra.mrb[0].mxu0 %v1729
        %v1866 = vpop.f32.mrb[0].mxu0
        %v1867 = vadd.f32 %v1689, %v1866
        %v1868 = vpop.f32.mrb[0].mxu0
        %1869 = vmatprep.mubr.f32.mxu0 0.0
        %1870 = vmatmul.mubr.f32.gmra.mrb[0].mxu0 %v1732
        %v1871 = vpop.f32.mrb[0].mxu0
        %v1872 = vadd.f32 %v1689, %v1871
        %v1873 = vpop.f32.mrb[0].mxu0
        %1874 = vmatprep.mubr.f32.mxu0 0.0
        %1875 = vmatmul.mubr.f32.gmra.mrb[0].mxu0 %v1735
        %v1876 = vpop.f32.mrb[0].mxu0
        %v1877 = vadd.f32 %v1689, %v1876
        %v1878 = vpop.f32.mrb[0].mxu0
        %1879 = vmatprep.mubr.f32.mxu0 0.0
        %1880 = vmatmul.mubr.f32.gmra.mrb[0].mxu0 %v1738
        %v1881 = vpop.f32.mrb[0].mxu0
        %v1882 = vadd.f32 %v1689, %v1881
        %v1883 = vpop.f32.mrb[0].mxu0
        %1884 = vdwg.mxu0
        %v1885 = vmax.f32 %v1807, 0.0
        %v1886 = vmax.f32 %v1812, 0.0
        %v1887 = vmax.f32 %v1817, 0.0
        %v1888 = vmax.f32 %v1822, 0.0
        %v1889 = vmax.f32 %v1827, 0.0
        %v1890 = vmax.f32 %v1832, 0.0
        %v1891 = vmax.f32 %v1837, 0.0
        %v1892 = vmax.f32 %v1842, 0.0
        %v1893 = vmax.f32 %v1847, 0.0
        %v1894 = vmax.f32 %v1852, 0.0
        %v1895 = vmax.f32 %v1857, 0.0
        %v1896 = vmax.f32 %v1862, 0.0
        %v1897 = vmax.f32 %v1867, 0.0
        %v1898 = vmax.f32 %v1872, 0.0
        %v1899 = vmax.f32 %v1877, 0.0
        %v1900 = vmax.f32 %v1882, 0.0
        %v1901 = vld [vmem:[%s11] sm:$0x1]
        %v1902 = vld [vmem:[%s12] sm:$0x1]
        %v1904 = vsel %vm721, %v1902, 0
        %v1907 = vsel %vm721, %v1885, 0
        %v1910 = vsel %vm721, %v1886, 0
        %v1913 = vsel %vm721, %v1887, 0
        %v1916 = vsel %vm721, %v1888, 0
        %v1919 = vsel %vm721, %v1889, 0
        %v1922 = vsel %vm721, %v1890, 0
        %v1925 = vsel %vm721, %v1891, 0
        %v1928 = vsel %vm721, %v1892, 0
        %v1931 = vsel %vm721, %v1893, 0
        %v1934 = vsel %vm721, %v1894, 0
        %v1937 = vsel %vm721, %v1895, 0
        %v1940 = vsel %vm721, %v1896, 0
        %v1943 = vsel %vm721, %v1897, 0
        %v1946 = vsel %vm721, %v1898, 0
        %v1949 = vsel %vm721, %v1899, 0
        %v1952 = vsel %vm721, %v1900, 0
        %1954 = vmatprep.subr.mxu0 0.0
        %1955 = vmatpush1.xpose.msra.mxu0 %v1907
        %1956 = vmatprep.subr.mxu0 0.0
        %1957 = vmatpush1.xpose.msra.mxu0 %v1910
        %1958 = vmatprep.subr.mxu0 0.0
        %1959 = vmatpush1.xpose.msra.mxu0 %v1913
        %1960 = vmatprep.subr.mxu0 0.0
        %1961 = vmatpush1.xpose.msra.mxu0 %v1916
        %1962 = vmatprep.subr.mxu0 0.0
        %1963 = vmatpush1.xpose.msra.mxu0 %v1919
        %1964 = vmatprep.subr.mxu0 0.0
        %1965 = vmatpush1.xpose.msra.mxu0 %v1922
        %1966 = vmatprep.subr.mxu0 0.0
        %1967 = vmatpush1.xpose.msra.mxu0 %v1925
        %1968 = vmatprep.subr.mxu0 0.0
        %1969 = vmatpush1.xpose.msra.mxu0 %v1928
        %1970 = vmatprep.subr.mxu0 0.0
        %1971 = vmatpush1.xpose.msra.mxu0 %v1931
        %1972 = vmatprep.subr.mxu0 0.0
        %1973 = vmatpush1.xpose.msra.mxu0 %v1934
        %1974 = vmatprep.subr.mxu0 0.0
        %1975 = vmatpush1.xpose.msra.mxu0 %v1937
        %1976 = vmatprep.subr.mxu0 0.0
        %1977 = vmatpush1.xpose.msra.mxu0 %v1940
        %1978 = vmatprep.subr.mxu0 0.0
        %1979 = vmatpush1.xpose.msra.mxu0 %v1943
        %1980 = vmatprep.subr.mxu0 0.0
        %1981 = vmatpush1.xpose.msra.mxu0 %v1946
        %1982 = vmatprep.subr.mxu0 0.0
        %1983 = vmatpush1.xpose.msra.mxu0 %v1949
        %1984 = vmatprep.subr.mxu0 0.0
        %1985 = vmatpush1.xpose.msra.mxu0 %v1952
        %1986 = vmatprep.subr.mxu0 0.0
        %1987 = vmatpush1.xpose.msra.mxu0 0.0
        %1988 = vmatprep.subr.mxu0 0.0
        %1989 = vmatpush1.xpose.msra.mxu0 0.0
        %1990 = vmatprep.subr.mxu0 0.0
        %1991 = vmatpush1.xpose.msra.mxu0 0.0
        %1992 = vmatprep.subr.mxu0 0.0
        %1993 = vmatpush1.xpose.msra.mxu0 0.0
        %1994 = vmatprep.subr.mxu0 0.0
        %1995 = vmatpush1.xpose.msra.mxu0 0.0
        %1996 = vmatprep.subr.mxu0 0.0
        %1997 = vmatpush1.xpose.msra.mxu0 0.0
        %1998 = vmatprep.subr.mxu0 0.0
        %1999 = vmatpush1.xpose.msra.mxu0 0.0
        %2000 = vmatprep.subr.mxu0 0.0
        %2001 = vmatpush1.xpose.msra.mxu0 0.0
        %2002 = vmatprep.subr.mxu0 0.0
        %2003 = vmatpush1.xpose.msra.mxu0 0.0
        %2004 = vmatprep.subr.mxu0 0.0
        %2005 = vmatpush1.xpose.msra.mxu0 0.0
        %2006 = vmatprep.subr.mxu0 0.0
        %2007 = vmatpush1.xpose.msra.mxu0 0.0
        %2008 = vmatprep.subr.mxu0 0.0
        %2009 = vmatpush1.xpose.msra.mxu0 0.0
        %2010 = vmatprep.subr.mxu0 0.0
        %2011 = vmatpush1.xpose.msra.mxu0 0.0
        %2012 = vmatprep.subr.mxu0 0.0
        %2013 = vmatpush1.xpose.msra.mxu0 0.0
        %2014 = vmatprep.subr.mxu0 0.0
        %2015 = vmatpush1.xpose.msra.mxu0 0.0
        %2016 = vmatprep.subr.mxu0 0.0
        %2017 = vmatpush1.xpose.msra.mxu0 0.0
        %2018 = vmatprep.mubr.f32.mxu0 0.0
        %2019 = vmatmul.mubr.f32.gmra.mrb[0].mxu0 %v1904
        %v2020 = vpop.f32.mrb[0].mxu0
        %v2021 = vadd.f32 0.0, %v2020
        %v2022 = vpop.f32.mrb[0].mxu0
        %2023 = vdwg.mxu0
        %2024 = vmatprep.subr.mxu0 0.0
        %2025 = vmatpush1.xpose.msra.mxu0 %v1115
        %2026 = vmatprep.subr.mxu0 0.0
        %2027 = vmatpush1.xpose.msra.mxu0 %v1116
        %2028 = vmatprep.subr.mxu0 0.0
        %2029 = vmatpush1.xpose.msra.mxu0 %v1117
        %2030 = vmatprep.subr.mxu0 0.0
        %2031 = vmatpush1.xpose.msra.mxu0 %v1118
        %2032 = vmatprep.subr.mxu0 0.0
        %2033 = vmatpush1.xpose.msra.mxu0 %v1119
        %2034 = vmatprep.subr.mxu0 0.0
        %2035 = vmatpush1.xpose.msra.mxu0 %v1120
        %2036 = vmatprep.subr.mxu0 0.0
        %2037 = vmatpush1.xpose.msra.mxu0 %v1121
        %2038 = vmatprep.subr.mxu0 0.0
        %2039 = vmatpush1.xpose.msra.mxu0 %v1122
        %2040 = vmatprep.subr.mxu0 0.0
        %2041 = vmatpush1.xpose.msra.mxu0 %v1123
        %2042 = vmatprep.subr.mxu0 0.0
        %2043 = vmatpush1.xpose.msra.mxu0 %v1124
        %2044 = vmatprep.subr.mxu0 0.0
        %2045 = vmatpush1.xpose.msra.mxu0 %v1125
        %2046 = vmatprep.subr.mxu0 0.0
        %2047 = vmatpush1.xpose.msra.mxu0 %v1126
        %2048 = vmatprep.subr.mxu0 0.0
        %2049 = vmatpush1.xpose.msra.mxu0 %v1127
        %2050 = vmatprep.subr.mxu0 0.0
        %2051 = vmatpush1.xpose.msra.mxu0 %v1128
        %2052 = vmatprep.subr.mxu0 0.0
        %2053 = vmatpush1.xpose.msra.mxu0 %v1129
        %2054 = vmatprep.subr.mxu0 0.0
        %2055 = vmatpush1.xpose.msra.mxu0 %v1130
        %2056 = vmatprep.subr.mxu0 0.0
        %2057 = vmatpush1.xpose.msra.mxu0 0.0
        %2058 = vmatprep.subr.mxu0 0.0
        %2059 = vmatpush1.xpose.msra.mxu0 0.0
        %2060 = vmatprep.subr.mxu0 0.0
        %2061 = vmatpush1.xpose.msra.mxu0 0.0
        %2062 = vmatprep.subr.mxu0 0.0
        %2063 = vmatpush1.xpose.msra.mxu0 0.0
        %2064 = vmatprep.subr.mxu0 0.0
        %2065 = vmatpush1.xpose.msra.mxu0 0.0
        %2066 = vmatprep.subr.mxu0 0.0
        %2067 = vmatpush1.xpose.msra.mxu0 0.0
        %2068 = vmatprep.subr.mxu0 0.0
        %2069 = vmatpush1.xpose.msra.mxu0 0.0
        %2070 = vmatprep.subr.mxu0 0.0
        %2071 = vmatpush1.xpose.msra.mxu0 0.0
        %2072 = vmatprep.subr.mxu0 0.0
        %2073 = vmatpush1.xpose.msra.mxu0 0.0
        %2074 = vmatprep.subr.mxu0 0.0
        %2075 = vmatpush1.xpose.msra.mxu0 0.0
        %2076 = vmatprep.subr.mxu0 0.0
        %2077 = vmatpush1.xpose.msra.mxu0 0.0
        %2078 = vmatprep.subr.mxu0 0.0
        %2079 = vmatpush1.xpose.msra.mxu0 0.0
        %2080 = vmatprep.subr.mxu0 0.0
        %2081 = vmatpush1.xpose.msra.mxu0 0.0
        %2082 = vmatprep.subr.mxu0 0.0
        %2083 = vmatpush1.xpose.msra.mxu0 0.0
        %2084 = vmatprep.subr.mxu0 0.0
        %2085 = vmatpush1.xpose.msra.mxu0 0.0
        %2086 = vmatprep.subr.mxu0 0.0
        %2087 = vmatpush1.xpose.msra.mxu0 0.0
        %2088 = vmatprep.mubr.f32.mxu0 0.0
        %2089 = vmatmul.mubr.f32.gmra.mrb[0].mxu0 %v1901
        %v2090 = vpop.f32.mrb[0].mxu0
        %v2091 = vadd.f32 %v2021, %v2090
        %v2092 = vpop.f32.mrb[0].mxu0
        %2093 = vdwg.mxu0
        %v2094 = vld [vmem:[#allocation2] sm:$0x1]
        %2096 = vset.pattern.permute.xlu0 0
        %2097 = vperm.xlu0 %2096, %v2094
        %v2098 = vpop.permute.xlu0 %2097
        %v2100 = vlaneseq
        %v2101 = vshrl.u32 %v2100, 7
        %v2102 = vsub.s32 0, %v2101
        %v2103 = vrot.slane %v2098, %v2102
        %v2104 = vadd.f32 %v2091, %v2103
        %v2105 = vxor.u32 %v2104, 2147483648
        %v2106 = vmul.f32 %v2105, 1.442695
        %v2107 = vpow.pop %v2106
        %v2108 = vadd.f32 %v2107, 1.0
        %v2109 = vrcp.pop %v2108
        %v2110 = vmul.f32 1.0, %v2109
        %2111 = vst [vmem:[%s478] sm:$0x1] %v2110
        %s2112 = sand.u32 %s342, 1
        %s2113 = scalar_lea.sflag [#allocation4], %s2112
        %s2114 = sand.u32 %s342, 1
        %s2115 = scalar_lea.vmem [#allocation3], %s2114
        // Predicated region
        $region77: #{ncf_forward.1} parent=75 // pred_check
          %p2116 = pneg %p352
        $region78: #{ncf_forward.1} parent=75 // pred_check_branch
          %2118 = sbr.rel (%p2116) target = $region80
        $region79: #{ncf_forward.1} parent=75 // pred_region
          %s2120 = ssub.s32 16, 16
          %2121 = vsyncadd %s2113, %s2120
          %s2122 = smul.addr %s30, 16
          %s2123 = scalar_lea.hbm %s14, %s2122
          %s2125 = sshll.u32 %s2115, 4
          %s2126 = int_to_ptr.vmem [resolvable:$true] %s2125
          %2128 = dma.vmem_to_hbm [thread:$0]  %s2126, 16, %s2123, %s2113
        $region80: #{ncf_forward.1} parent=75 // pred_fallthru
          _
      $region76: #{ncf_forward.1} parent=5 // pred_fallthru
        _
      %p2129 = scmp.le.s32.totalorder 2, %s25
      // Predicated region
      $region81: #{ncf_forward.1} parent=5 // pred_check
        %p2130 = pneg %p2129
      $region82: #{ncf_forward.1} parent=5 // pred_check_branch
        %2132 = sbr.rel (%p2130) target = $region84
      $region83: #{ncf_forward.1} parent=5 // pred_region
        %s2133 = ssub.s32 %s25, 2
        // Predicated region
        $region85: #{ncf_forward.1} parent=83 // pred_check
          %p2134 = pneg %p358
        $region86: #{ncf_forward.1} parent=83 // pred_check_branch
          %2136 = sbr.rel (%p2134) target = $region88
        $region87: #{ncf_forward.1} parent=83 // pred_region
          %s2137 = sand.u32 %s343, 1
          %s2138 = scalar_lea.sflag [#allocation4], %s2137
          %s2139 = sand.u32 %s343, 1
          %s2140 = scalar_lea.vmem [#allocation3], %s2139
          %2141 = dma.done %s2138, 16
        $region88: #{ncf_forward.1} parent=83 // pred_fallthru
          _
      $region84: #{ncf_forward.1} parent=5 // pred_fallthru
        _
    $region6: #{ncf_forward.1} parent=1 // loop_footer
      %s29 = sadd.s32 1, %s25
    $region7: #{ncf_forward.1} parent=1 // loop_footer_branch
      %24 = sbr.rel target = $region3
    $region8: #{ncf_forward.1} parent=1 // loop_exit
      _
    %2142 = vsyncpa [#allocation4], 1
    %s2143 = scalar_lea.sflag [#allocation4], 1
    %2144 = vsyncpa %s2143, 1

</llo_original>
